<compile_context>
chip_gen: v7x
topology: tpu7x:2x2x1
jax: 0.10.0
libtpu: 0.0.40
codegen_flags: <defaults>
</compile_context>

<pallas_src>
import functools

import numpy as np
import jax
import jax.numpy as jnp
from jax import lax
from jax.experimental import pallas as pl
from jax.experimental.pallas import tpu as pltpu


def _round_up(a: int, b: int) -> int:
    return (a + b - 1) // b * b


def _freq_bands(n_freqs: int, log_space: bool):
    # Mirrors the PyTorch module's frequency construction.
    if n_freqs <= 0:
        return []
    if log_space:
        return [float(2.0 ** e) for e in np.linspace(0.0, n_freqs - 1, n_freqs)]
    return [float(f) for f in np.linspace(2.0 ** 0.0, 2.0 ** (n_freqs - 1), n_freqs)]


def _pe_kernel(x_ref, o_ref, *, freqs, log_space, exact, chunk):
    """Per-tile body.

    x_ref: (tile_m, 128) lane+sublane dense block of the flattened input.
    o_ref: (1 + 2*n_freqs, tile_m, 128); part k is stored DIRECTLY at o_ref[k]
           (full-lane, unmasked vst; no in-kernel concatenate).

    The tile is strip-mined into (chunk, 128) row chunks so at most ~8 values of
    shape (chunk, 128) are live simultaneously (chunk<=32 -> <=32 vregs), which
    keeps the 10-frequency unrolled math out of VMEM spills.
    NOTE: jnp.sin/jnp.cos lower to VPU polynomial expansions (~20-25 VALU ops
    each), not single EUP pushes -- that is why the recurrence matters.
    """
    nf = len(freqs)
    tile_rows = x_ref.shape[0]
    nchunks = tile_rows // chunk  # wrapper guarantees exact divisibility

    def run_chunk(r0):
        rows = pl.ds(r0, chunk)
        x = x_ref[rows, :]
        o_ref[0, rows, :] = x.astype(o_ref.dtype)              # identity part
        if not nf:
            return
        xf = x.astype(jnp.float32)                             # f32 compute (v5e-safe)
        if exact:
            # Bit-faithful path: one sin + one cos polynomial per frequency.
            for i, f in enumerate(freqs):
                z = xf * jnp.float32(f)                        # VPU mul
                o_ref[1 + 2 * i, rows, :] = jnp.sin(z).astype(o_ref.dtype)
                o_ref[2 + 2 * i, rows, :] = jnp.cos(z).astype(o_ref.dtype)
        else:
            # Fast path: seed with sin/cos of the first angle (f0 == 1 for both
            # spacings) and advance frequencies with a cheap recurrence.
            z0 = xf * jnp.float32(freqs[0])
            s, c = jnp.sin(z0), jnp.cos(z0)
            o_ref[1, rows, :] = s.astype(o_ref.dtype)
            o_ref[2, rows, :] = c.astype(o_ref.dtype)
            if nf > 1 and not log_space:
                zd = xf * jnp.float32(freqs[1] - freqs[0])     # constant step
                sd, cd = jnp.sin(zd), jnp.cos(zd)
            for i in range(1, nf):
                if log_space:
                    # f_i = 2 * f_{i-1}: double-angle formulas.
                    s, c = 2.0 * s * c, 1.0 - 2.0 * s * s
                else:
                    # f_i = f_{i-1} + delta: angle-addition formulas.
                    s, c = s * cd + c * sd, c * cd - s * sd
                o_ref[1 + 2 * i, rows, :] = s.astype(o_ref.dtype)
                o_ref[2 + 2 * i, rows, :] = c.astype(o_ref.dtype)

    if nchunks <= 8:
        # Small tiles: fully static slices (tiny code size).
        for ci in range(nchunks):
            run_chunk(ci * chunk)
    else:
        # Large tiles: rolled loop keeps code size bounded and live ranges tight.
        def body(ci, carry):
            run_chunk(pl.multiple_of(ci * chunk, 8))
            return carry
        lax.fori_loop(0, nchunks, body, 0)


def positional_encoder(x, n_freqs: int, log_space: bool = False, *,
                       tile_m: int = 1024, out_dtype=None,
                       exact_transcendentals: bool = False,
                       native_layout: bool = False):
    """Pallas equivalent of PositionalEncoder.forward.

    x: [..., d_input] float array.
    Returns [..., d_input * (1 + 2 * n_freqs)] (PyTorch layout), or the
    kernel-native [1 + 2*n_freqs, ..., d_input] slab when native_layout=True
    (skips the transposed re-write of the amplified output).

    exact_transcendentals=False (default) uses a double-angle / angle-addition
    recurrence; it agrees with direct evaluation to O(|x| * f_max * eps)
    (~a few 1e-4 absolute for |x|~4, n_freqs=10) since both carry the same
    argument-rounding error.  Set True for a bit-faithful match.
    """
    *lead, d_input = x.shape
    n = int(np.prod(lead)) if lead else 1
    p = 1 + 2 * n_freqs
    freqs = _freq_bands(n_freqs, log_space)
    out_dtype = x.dtype if out_dtype is None else jnp.dtype(out_dtype)

    lanes = 128
    total = n * d_input
    m_needed = pl.cdiv(total, lanes)
    m_min = _round_up(m_needed, 8)

    # Tile sanitation:
    #  - default / cap 1024 rows: double-buffered in+out f32 blocks ~22 MiB,
    #    under the 32 MiB scoped-VMEM default on all generations (incl. v7x).
    #  - clamp so grid >= 2 whenever there are >= 16 rows (v7x megacore).
    #  - keep tiles > 128 a multiple of 128 so the in-kernel chunking divides.
    tile = max(8, min(int(tile_m), 1024))
    tile = min(tile, m_min)
    if m_min >= 16:
        tile = min(tile, _round_up(pl.cdiv(m_min, 2), 8))
    if tile > 128:
        tile = (tile // 128) * 128
    tile = max(8, _round_up(tile, 8))
    if tile <= 32:
        chunk = tile
    elif tile % 32 == 0:
        chunk = 32
    else:
        chunk = 8
    m_total = _round_up(m_min, tile)
    pad = m_total * lanes - total

    x_flat = x.reshape(total)            # row-major collapse: bitcast, no copy
    if pad:
        # allow_input_fusion below lets XLA fuse this pad into the kernel's
        # input DMA; otherwise it is one (input-sized, ~4%) extra copy.
        x_flat = jnp.pad(x_flat, (0, pad))
    x2d = x_flat.reshape(m_total, lanes)

    kernel = functools.partial(_pe_kernel, freqs=freqs, log_space=bool(log_space),
                               exact=bool(exact_transcendentals), chunk=chunk)

    # Advisory cost model.  sin/cos are VPU polynomials (~20-25 VALU ops each);
    # count them both as transcendentals and as flops so XLA sees a fair cost.
    n_elem = m_total * lanes
    if exact_transcendentals:
        trans = 2 * n_freqs * n_elem
        flops = (n_freqs + 40 * n_freqs) * n_elem
    else:
        seeds = 2 if (log_space or n_freqs <= 1) else 4
        trans = seeds * n_elem
        flops = (20 * seeds + 6 * max(n_freqs - 1, 0)) * n_elem
    cost = pl.CostEstimate(
        flops=int(flops),
        transcendentals=int(trans),
        bytes_accessed=int(x2d.dtype.itemsize * n_elem
                           + jnp.dtype(out_dtype).itemsize * n_elem * p),
    )

    out = pl.pallas_call(
        kernel,
        out_shape=jax.ShapeDtypeStruct((p, m_total, lanes), out_dtype),
        grid_spec=pltpu.PrefetchScalarGridSpec(
            num_scalar_prefetch=0,
            grid=(m_total // tile,),
            in_specs=[pl.BlockSpec((tile, lanes), lambda i: (i, 0))],
            out_specs=pl.BlockSpec((p, tile, lanes), lambda i: (0, i, 0)),
        ),
        compiler_params=pltpu.CompilerParams(
            dimension_semantics=("parallel",),   # shards rows across v7x's 2 TCs
            allow_input_fusion=[True],           # fuse pad/reshape into input DMA
        ),
        cost_estimate=cost,
    )(x2d)

    out = out.reshape(p, m_total * lanes)[:, :total]
    if native_layout:
        # Kernel-native layout: no transposed re-write of the (1+2F)x-amplified
        # output.  Consumers can permute their first-layer weight columns once.
        return out.reshape((p,) + tuple(lead) + (d_input,))
    # PyTorch interleaved layout [x, sin(f0 x), cos(f0 x), ...] along the last
    # dim.  This permutation is one extra read+write of the amplified output;
    # pass native_layout=True to avoid it when the consumer allows.
    out = out.reshape(p, n, d_input).transpose(1, 0, 2).reshape(n, p * d_input)
    return out.reshape(tuple(lead) + (p * d_input,))


def positional_encoder_ref(x, n_freqs: int, log_space: bool = False):
    """Pure-JAX reference mirroring the PyTorch module."""
    freqs = _freq_bands(n_freqs, log_space)
    parts = [x]
    for f in freqs:
        parts.append(jnp.sin(x * f))
        parts.append(jnp.cos(x * f))
    return jnp.concatenate(parts, axis=-1)


if __name__ == "__main__":
    n_freqs = 10

    # Test 1: NeRF-style point batch, linear frequency spacing, default fast
    # path (angle-addition recurrence), multi-tile grid + rolled chunk loop.
    N, d_input = 32768, 3
    x = jax.random.normal(jax.random.PRNGKey(0), (N, d_input), dtype=jnp.float32)
    out = jax.block_until_ready(
        positional_encoder(x, n_freqs=n_freqs, log_space=False))
    ref = positional_encoder_ref(x, n_freqs=n_freqs, log_space=False)
    assert out.shape == (N, d_input * (1 + 2 * n_freqs)), out.shape
    # Recurrence and direct sin(x*f) both carry O(|x|*f_max*eps) argument
    # rounding; they agree to a few 1e-4 absolute at f_max = 512 here.
    err = float(jnp.max(jnp.abs(out - ref)))
    assert err < 2e-3, err

    # Test 2: small batch, log-spaced frequencies, exact per-frequency sin/cos
    # (bit-faithful path) -> tight tolerance; also checks the native layout.
    x2 = jax.random.normal(jax.random.PRNGKey(1), (256, 3), dtype=jnp.float32)
    out2 = jax.block_until_ready(
        positional_encoder(x2, n_freqs=n_freqs, log_space=True,
                           exact_transcendentals=True))
    ref2 = positional_encoder_ref(x2, n_freqs=n_freqs, log_space=True)
    assert out2.shape == (256, 3 * (1 + 2 * n_freqs)), out2.shape
    assert jnp.allclose(out2, ref2, atol=1e-5, rtol=1e-5), \
        float(jnp.max(jnp.abs(out2 - ref2)))

    nat = jax.block_until_ready(
        positional_encoder(x2, n_freqs=n_freqs, log_space=True,
                           exact_transcendentals=True, native_layout=True))
    ref2_nat = ref2.reshape(256, 1 + 2 * n_freqs, 3).transpose(1, 0, 2)
    assert nat.shape == (1 + 2 * n_freqs, 256, 3), nat.shape
    assert jnp.allclose(nat, ref2_nat, atol=1e-5, rtol=1e-5)

    print("KERNEL_OK")
</pallas_src>

<mosaic_0001>
module attributes {stable_mosaic.version = 11 : i64} {
  func.func @_pe_kernel(%arg0: i32, %arg1: memref<384x128xf32, #tpu.memory_space<vmem>>, %arg2: memref<21x384x128xf32, #tpu.memory_space<vmem>>) attributes {dimension_semantics = [#tpu.dimension_semantics<parallel>], iteration_bounds = array<i64: 2>, scalar_prefetch = 0 : i64, scratch_operands = 0 : i64, tpu.core_type = #tpu.core_type<tc>, window_params = [{transform_indices = @transform_0, window_bounds = array<i64: 384, 128>}, {transform_indices = @transform_1, window_bounds = array<i64: 21, 384, 128>}]} {
    %c0_i32 = arith.constant 0 : i32
    %c12_i32 = arith.constant 12 : i32
    %0 = arith.addi %c0_i32, %c12_i32 : i32
    %c1_i32 = arith.constant 1 : i32
    scf.for %arg3 = %c0_i32 to %0 step %c1_i32  : i32 {
      %c32_i32 = arith.constant 32 : i32
      %1 = arith.muli %arg3, %c32_i32 : i32
      %2 = tpu.assume_multiple %1, 8 : i32
      %3 = arith.index_cast %2 : i32 to index
      %c0 = arith.constant 0 : index
      %4 = vector.load %arg1[%3, %c0] : memref<384x128xf32, #tpu.memory_space<vmem>>, vector<32x128xf32>
      %c0_1 = arith.constant 0 : index
      %5 = arith.index_cast %2 : i32 to index
      %c0_2 = arith.constant 0 : index
      %6 = vector.load %arg2[%c0_1, %5, %c0_2] : memref<21x384x128xf32, #tpu.memory_space<vmem>>, vector<1x32x128xf32>
      %7 = vector.shape_cast %6 : vector<1x32x128xf32> to vector<32x128xf32>
      %8 = vector.shape_cast %4 : vector<32x128xf32> to vector<1x32x128xf32>
      tpu.vector_store %arg2[%c0_1, %5, %c0_2], %8 {strides = array<i32>} : memref<21x384x128xf32, #tpu.memory_space<vmem>>, vector<1x32x128xf32>,
      %cst = arith.constant 1.000000e+00 : f32
      %9 = vector.broadcast %cst : f32 to vector<32x128xf32>
      %10 = arith.mulf %4, %9 : vector<32x128xf32>
      %11 = math.sin %10 : vector<32x128xf32>
      %12 = math.cos %10 : vector<32x128xf32>
      %c1 = arith.constant 1 : index
      %13 = arith.index_cast %2 : i32 to index
      %c0_3 = arith.constant 0 : index
      %14 = vector.load %arg2[%c1, %13, %c0_3] : memref<21x384x128xf32, #tpu.memory_space<vmem>>, vector<1x32x128xf32>
      %15 = vector.shape_cast %14 : vector<1x32x128xf32> to vector<32x128xf32>
      %16 = vector.shape_cast %11 : vector<32x128xf32> to vector<1x32x128xf32>
      tpu.vector_store %arg2[%c1, %13, %c0_3], %16 {strides = array<i32>} : memref<21x384x128xf32, #tpu.memory_space<vmem>>, vector<1x32x128xf32>,
      %c2 = arith.constant 2 : index
      %17 = arith.index_cast %2 : i32 to index
      %c0_4 = arith.constant 0 : index
      %18 = vector.load %arg2[%c2, %17, %c0_4] : memref<21x384x128xf32, #tpu.memory_space<vmem>>, vector<1x32x128xf32>
      %19 = vector.shape_cast %18 : vector<1x32x128xf32> to vector<32x128xf32>
      %20 = vector.shape_cast %12 : vector<32x128xf32> to vector<1x32x128xf32>
      tpu.vector_store %arg2[%c2, %17, %c0_4], %20 {strides = array<i32>} : memref<21x384x128xf32, #tpu.memory_space<vmem>>, vector<1x32x128xf32>,
      %cst_5 = arith.constant 56.7777786 : f32
      %21 = vector.broadcast %cst_5 : f32 to vector<32x128xf32>
      %22 = arith.mulf %4, %21 : vector<32x128xf32>
      %23 = math.sin %22 : vector<32x128xf32>
      %24 = math.cos %22 : vector<32x128xf32>
      %25 = arith.mulf %11, %24 : vector<32x128xf32>
      %26 = arith.mulf %12, %23 : vector<32x128xf32>
      %27 = arith.addf %25, %26 : vector<32x128xf32>
      %28 = arith.mulf %12, %24 : vector<32x128xf32>
      %29 = arith.mulf %11, %23 : vector<32x128xf32>
      %30 = arith.subf %28, %29 : vector<32x128xf32>
      %c3 = arith.constant 3 : index
      %31 = arith.index_cast %2 : i32 to index
      %c0_6 = arith.constant 0 : index
      %32 = vector.load %arg2[%c3, %31, %c0_6] : memref<21x384x128xf32, #tpu.memory_space<vmem>>, vector<1x32x128xf32>
      %33 = vector.shape_cast %32 : vector<1x32x128xf32> to vector<32x128xf32>
      %34 = vector.shape_cast %27 : vector<32x128xf32> to vector<1x32x128xf32>
      tpu.vector_store %arg2[%c3, %31, %c0_6], %34 {strides = array<i32>} : memref<21x384x128xf32, #tpu.memory_space<vmem>>, vector<1x32x128xf32>,
      %c4 = arith.constant 4 : index
      %35 = arith.index_cast %2 : i32 to index
      %c0_7 = arith.constant 0 : index
      %36 = vector.load %arg2[%c4, %35, %c0_7] : memref<21x384x128xf32, #tpu.memory_space<vmem>>, vector<1x32x128xf32>
      %37 = vector.shape_cast %36 : vector<1x32x128xf32> to vector<32x128xf32>
      %38 = vector.shape_cast %30 : vector<32x128xf32> to vector<1x32x128xf32>
      tpu.vector_store %arg2[%c4, %35, %c0_7], %38 {strides = array<i32>} : memref<21x384x128xf32, #tpu.memory_space<vmem>>, vector<1x32x128xf32>,
      %39 = arith.mulf %27, %24 : vector<32x128xf32>
      %40 = arith.mulf %30, %23 : vector<32x128xf32>
      %41 = arith.addf %39, %40 : vector<32x128xf32>
      %42 = arith.mulf %30, %24 : vector<32x128xf32>
      %43 = arith.mulf %27, %23 : vector<32x128xf32>
      %44 = arith.subf %42, %43 : vector<32x128xf32>
      %c5 = arith.constant 5 : index
      %45 = arith.index_cast %2 : i32 to index
      %c0_8 = arith.constant 0 : index
      %46 = vector.load %arg2[%c5, %45, %c0_8] : memref<21x384x128xf32, #tpu.memory_space<vmem>>, vector<1x32x128xf32>
      %47 = vector.shape_cast %46 : vector<1x32x128xf32> to vector<32x128xf32>
      %48 = vector.shape_cast %41 : vector<32x128xf32> to vector<1x32x128xf32>
      tpu.vector_store %arg2[%c5, %45, %c0_8], %48 {strides = array<i32>} : memref<21x384x128xf32, #tpu.memory_space<vmem>>, vector<1x32x128xf32>,
      %c6 = arith.constant 6 : index
      %49 = arith.index_cast %2 : i32 to index
      %c0_9 = arith.constant 0 : index
      %50 = vector.load %arg2[%c6, %49, %c0_9] : memref<21x384x128xf32, #tpu.memory_space<vmem>>, vector<1x32x128xf32>
      %51 = vector.shape_cast %50 : vector<1x32x128xf32> to vector<32x128xf32>
      %52 = vector.shape_cast %44 : vector<32x128xf32> to vector<1x32x128xf32>
      tpu.vector_store %arg2[%c6, %49, %c0_9], %52 {strides = array<i32>} : memref<21x384x128xf32, #tpu.memory_space<vmem>>, vector<1x32x128xf32>,
      %53 = arith.mulf %41, %24 : vector<32x128xf32>
      %54 = arith.mulf %44, %23 : vector<32x128xf32>
      %55 = arith.addf %53, %54 : vector<32x128xf32>
      %56 = arith.mulf %44, %24 : vector<32x128xf32>
      %57 = arith.mulf %41, %23 : vector<32x128xf32>
      %58 = arith.subf %56, %57 : vector<32x128xf32>
      %c7 = arith.constant 7 : index
      %59 = arith.index_cast %2 : i32 to index
      %c0_10 = arith.constant 0 : index
      %60 = vector.load %arg2[%c7, %59, %c0_10] : memref<21x384x128xf32, #tpu.memory_space<vmem>>, vector<1x32x128xf32>
      %61 = vector.shape_cast %60 : vector<1x32x128xf32> to vector<32x128xf32>
      %62 = vector.shape_cast %55 : vector<32x128xf32> to vector<1x32x128xf32>
      tpu.vector_store %arg2[%c7, %59, %c0_10], %62 {strides = array<i32>} : memref<21x384x128xf32, #tpu.memory_space<vmem>>, vector<1x32x128xf32>,
      %c8 = arith.constant 8 : index
      %63 = arith.index_cast %2 : i32 to index
      %c0_11 = arith.constant 0 : index
      %64 = vector.load %arg2[%c8, %63, %c0_11] : memref<21x384x128xf32, #tpu.memory_space<vmem>>, vector<1x32x128xf32>
      %65 = vector.shape_cast %64 : vector<1x32x128xf32> to vector<32x128xf32>
      %66 = vector.shape_cast %58 : vector<32x128xf32> to vector<1x32x128xf32>
      tpu.vector_store %arg2[%c8, %63, %c0_11], %66 {strides = array<i32>} : memref<21x384x128xf32, #tpu.memory_space<vmem>>, vector<1x32x128xf32>,
      %67 = arith.mulf %55, %24 : vector<32x128xf32>
      %68 = arith.mulf %58, %23 : vector<32x128xf32>
      %69 = arith.addf %67, %68 : vector<32x128xf32>
      %70 = arith.mulf %58, %24 : vector<32x128xf32>
      %71 = arith.mulf %55, %23 : vector<32x128xf32>
      %72 = arith.subf %70, %71 : vector<32x128xf32>
      %c9 = arith.constant 9 : index
      %73 = arith.index_cast %2 : i32 to index
      %c0_12 = arith.constant 0 : index
      %74 = vector.load %arg2[%c9, %73, %c0_12] : memref<21x384x128xf32, #tpu.memory_space<vmem>>, vector<1x32x128xf32>
      %75 = vector.shape_cast %74 : vector<1x32x128xf32> to vector<32x128xf32>
      %76 = vector.shape_cast %69 : vector<32x128xf32> to vector<1x32x128xf32>
      tpu.vector_store %arg2[%c9, %73, %c0_12], %76 {strides = array<i32>} : memref<21x384x128xf32, #tpu.memory_space<vmem>>, vector<1x32x128xf32>,
      %c10 = arith.constant 10 : index
      %77 = arith.index_cast %2 : i32 to index
      %c0_13 = arith.constant 0 : index
      %78 = vector.load %arg2[%c10, %77, %c0_13] : memref<21x384x128xf32, #tpu.memory_space<vmem>>, vector<1x32x128xf32>
      %79 = vector.shape_cast %78 : vector<1x32x128xf32> to vector<32x128xf32>
      %80 = vector.shape_cast %72 : vector<32x128xf32> to vector<1x32x128xf32>
      tpu.vector_store %arg2[%c10, %77, %c0_13], %80 {strides = array<i32>} : memref<21x384x128xf32, #tpu.memory_space<vmem>>, vector<1x32x128xf32>,
      %81 = arith.mulf %69, %24 : vector<32x128xf32>
      %82 = arith.mulf %72, %23 : vector<32x128xf32>
      %83 = arith.addf %81, %82 : vector<32x128xf32>
      %84 = arith.mulf %72, %24 : vector<32x128xf32>
      %85 = arith.mulf %69, %23 : vector<32x128xf32>
      %86 = arith.subf %84, %85 : vector<32x128xf32>
      %c11 = arith.constant 11 : index
      %87 = arith.index_cast %2 : i32 to index
      %c0_14 = arith.constant 0 : index
      %88 = vector.load %arg2[%c11, %87, %c0_14] : memref<21x384x128xf32, #tpu.memory_space<vmem>>, vector<1x32x128xf32>
      %89 = vector.shape_cast %88 : vector<1x32x128xf32> to vector<32x128xf32>
      %90 = vector.shape_cast %83 : vector<32x128xf32> to vector<1x32x128xf32>
      tpu.vector_store %arg2[%c11, %87, %c0_14], %90 {strides = array<i32>} : memref<21x384x128xf32, #tpu.memory_space<vmem>>, vector<1x32x128xf32>,
      %c12 = arith.constant 12 : index
      %91 = arith.index_cast %2 : i32 to index
      %c0_15 = arith.constant 0 : index
      %92 = vector.load %arg2[%c12, %91, %c0_15] : memref<21x384x128xf32, #tpu.memory_space<vmem>>, vector<1x32x128xf32>
      %93 = vector.shape_cast %92 : vector<1x32x128xf32> to vector<32x128xf32>
      %94 = vector.shape_cast %86 : vector<32x128xf32> to vector<1x32x128xf32>
      tpu.vector_store %arg2[%c12, %91, %c0_15], %94 {strides = array<i32>} : memref<21x384x128xf32, #tpu.memory_space<vmem>>, vector<1x32x128xf32>,
      %95 = arith.mulf %83, %24 : vector<32x128xf32>
      %96 = arith.mulf %86, %23 : vector<32x128xf32>
      %97 = arith.addf %95, %96 : vector<32x128xf32>
      %98 = arith.mulf %86, %24 : vector<32x128xf32>
      %99 = arith.mulf %83, %23 : vector<32x128xf32>
      %100 = arith.subf %98, %99 : vector<32x128xf32>
      %c13 = arith.constant 13 : index
      %101 = arith.index_cast %2 : i32 to index
      %c0_16 = arith.constant 0 : index
      %102 = vector.load %arg2[%c13, %101, %c0_16] : memref<21x384x128xf32, #tpu.memory_space<vmem>>, vector<1x32x128xf32>
      %103 = vector.shape_cast %102 : vector<1x32x128xf32> to vector<32x128xf32>
      %104 = vector.shape_cast %97 : vector<32x128xf32> to vector<1x32x128xf32>
      tpu.vector_store %arg2[%c13, %101, %c0_16], %104 {strides = array<i32>} : memref<21x384x128xf32, #tpu.memory_space<vmem>>, vector<1x32x128xf32>,
      %c14 = arith.constant 14 : index
      %105 = arith.index_cast %2 : i32 to index
      %c0_17 = arith.constant 0 : index
      %106 = vector.load %arg2[%c14, %105, %c0_17] : memref<21x384x128xf32, #tpu.memory_space<vmem>>, vector<1x32x128xf32>
      %107 = vector.shape_cast %106 : vector<1x32x128xf32> to vector<32x128xf32>
      %108 = vector.shape_cast %100 : vector<32x128xf32> to vector<1x32x128xf32>
      tpu.vector_store %arg2[%c14, %105, %c0_17], %108 {strides = array<i32>} : memref<21x384x128xf32, #tpu.memory_space<vmem>>, vector<1x32x128xf32>,
      %109 = arith.mulf %97, %24 : vector<32x128xf32>
      %110 = arith.mulf %100, %23 : vector<32x128xf32>
      %111 = arith.addf %109, %110 : vector<32x128xf32>
      %112 = arith.mulf %100, %24 : vector<32x128xf32>
      %113 = arith.mulf %97, %23 : vector<32x128xf32>
      %114 = arith.subf %112, %113 : vector<32x128xf32>
      %c15 = arith.constant 15 : index
      %115 = arith.index_cast %2 : i32 to index
      %c0_18 = arith.constant 0 : index
      %116 = vector.load %arg2[%c15, %115, %c0_18] : memref<21x384x128xf32, #tpu.memory_space<vmem>>, vector<1x32x128xf32>
      %117 = vector.shape_cast %116 : vector<1x32x128xf32> to vector<32x128xf32>
      %118 = vector.shape_cast %111 : vector<32x128xf32> to vector<1x32x128xf32>
      tpu.vector_store %arg2[%c15, %115, %c0_18], %118 {strides = array<i32>} : memref<21x384x128xf32, #tpu.memory_space<vmem>>, vector<1x32x128xf32>,
      %c16 = arith.constant 16 : index
      %119 = arith.index_cast %2 : i32 to index
      %c0_19 = arith.constant 0 : index
      %120 = vector.load %arg2[%c16, %119, %c0_19] : memref<21x384x128xf32, #tpu.memory_space<vmem>>, vector<1x32x128xf32>
      %121 = vector.shape_cast %120 : vector<1x32x128xf32> to vector<32x128xf32>
      %122 = vector.shape_cast %114 : vector<32x128xf32> to vector<1x32x128xf32>
      tpu.vector_store %arg2[%c16, %119, %c0_19], %122 {strides = array<i32>} : memref<21x384x128xf32, #tpu.memory_space<vmem>>, vector<1x32x128xf32>,
      %123 = arith.mulf %111, %24 : vector<32x128xf32>
      %124 = arith.mulf %114, %23 : vector<32x128xf32>
      %125 = arith.addf %123, %124 : vector<32x128xf32>
      %126 = arith.mulf %114, %24 : vector<32x128xf32>
      %127 = arith.mulf %111, %23 : vector<32x128xf32>
      %128 = arith.subf %126, %127 : vector<32x128xf32>
      %c17 = arith.constant 17 : index
      %129 = arith.index_cast %2 : i32 to index
      %c0_20 = arith.constant 0 : index
      %130 = vector.load %arg2[%c17, %129, %c0_20] : memref<21x384x128xf32, #tpu.memory_space<vmem>>, vector<1x32x128xf32>
      %131 = vector.shape_cast %130 : vector<1x32x128xf32> to vector<32x128xf32>
      %132 = vector.shape_cast %125 : vector<32x128xf32> to vector<1x32x128xf32>
      tpu.vector_store %arg2[%c17, %129, %c0_20], %132 {strides = array<i32>} : memref<21x384x128xf32, #tpu.memory_space<vmem>>, vector<1x32x128xf32>,
      %c18 = arith.constant 18 : index
      %133 = arith.index_cast %2 : i32 to index
      %c0_21 = arith.constant 0 : index
      %134 = vector.load %arg2[%c18, %133, %c0_21] : memref<21x384x128xf32, #tpu.memory_space<vmem>>, vector<1x32x128xf32>
      %135 = vector.shape_cast %134 : vector<1x32x128xf32> to vector<32x128xf32>
      %136 = vector.shape_cast %128 : vector<32x128xf32> to vector<1x32x128xf32>
      tpu.vector_store %arg2[%c18, %133, %c0_21], %136 {strides = array<i32>} : memref<21x384x128xf32, #tpu.memory_space<vmem>>, vector<1x32x128xf32>,
      %137 = arith.mulf %125, %24 : vector<32x128xf32>
      %138 = arith.mulf %128, %23 : vector<32x128xf32>
      %139 = arith.addf %137, %138 : vector<32x128xf32>
      %140 = arith.mulf %128, %24 : vector<32x128xf32>
      %141 = arith.mulf %125, %23 : vector<32x128xf32>
      %142 = arith.subf %140, %141 : vector<32x128xf32>
      %c19 = arith.constant 19 : index
      %143 = arith.index_cast %2 : i32 to index
      %c0_22 = arith.constant 0 : index
      %144 = vector.load %arg2[%c19, %143, %c0_22] : memref<21x384x128xf32, #tpu.memory_space<vmem>>, vector<1x32x128xf32>
      %145 = vector.shape_cast %144 : vector<1x32x128xf32> to vector<32x128xf32>
      %146 = vector.shape_cast %139 : vector<32x128xf32> to vector<1x32x128xf32>
      tpu.vector_store %arg2[%c19, %143, %c0_22], %146 {strides = array<i32>} : memref<21x384x128xf32, #tpu.memory_space<vmem>>, vector<1x32x128xf32>,
      %c20 = arith.constant 20 : index
      %147 = arith.index_cast %2 : i32 to index
      %c0_23 = arith.constant 0 : index
      %148 = vector.load %arg2[%c20, %147, %c0_23] : memref<21x384x128xf32, #tpu.memory_space<vmem>>, vector<1x32x128xf32>
      %149 = vector.shape_cast %148 : vector<1x32x128xf32> to vector<32x128xf32>
      %150 = vector.shape_cast %142 : vector<32x128xf32> to vector<1x32x128xf32>
      tpu.vector_store %arg2[%c20, %147, %c0_23], %150 {strides = array<i32>} : memref<21x384x128xf32, #tpu.memory_space<vmem>>, vector<1x32x128xf32>,
    }
    %c12_i32_0 = arith.constant 12 : i32
    return
  }
  func.func @transform_0(%arg0: i32) -> (i32, i32) {
    %c0_i32 = arith.constant 0 : i32
    %c0_i32_0 = arith.constant 0 : i32
    return %arg0, %c0_i32 : i32, i32
  }
  func.func @transform_1(%arg0: i32) -> (i32, i32, i32) {
    %c0_i32 = arith.constant 0 : i32
    %c0_i32_0 = arith.constant 0 : i32
    %c0_i32_1 = arith.constant 0 : i32
    return %c0_i32, %arg0, %c0_i32_0 : i32, i32, i32
  }
}

</mosaic_0001>

<llo_original>
// kernel: tpu_custom_call.1
$region0: #{tpu_custom_call.1}
  #allocation0 [shape = 'u32[]', space=smem, size = 0x4, offset = 0x4, fixed_abs, tag = 'smem constant byte address 0x4 - core index']
  #allocation1 [shape = 'u32[144,128]{1,0:T(1,128)}', space=vmem, size = 0x12000, scoped, tag = 'internal scratch']
  #allocation6 [shape = 's32[]', space=sflag, size = 0x4, offset = 0, fixed_abs, tag = 'sflag constant byte address 0x0 - dummy sync flag']
  %s0 = inlined_call_operand.hbm [shape: f32[768,128], index: 0, kind: input, shape index: {}]
  %s1 = inlined_call_operand.hbm [shape: f32[21,768,128], index: 1, kind: output, shape index: {}]
  %s2 = sld [smem:[#allocation0]]
  $region48: #{tpu_custom_call.1} parent=0
    _
  %s4 = ssub.s32 1, %s2
  %s5 = scalar_select 0, %s4, %s2
  $region1: #{tpu_custom_call.1} parent=0
    #allocation2 [shape = 'u8[393216]{0}', space=vmem, size = 0x60000, scoped, tag = 'input window, operand 0']
    #allocation3 [shape = 's32[2]{0}', space=sflag, size = 0x8, scoped, tag = 'scoped memory for tpu_custom_call.1']
    #allocation4 [shape = 's32[2]{0}', space=sflag, size = 0x8, scoped, tag = 'scoped memory for tpu_custom_call.1']
    #allocation5 [shape = 'u8[8257536]{0}', space=vmem, size = 0x7e0000, scoped, tag = 'output window, operand 0']
    %6 = vsyncpa [#allocation3], 0
    %s7 = scalar_lea.sflag [#allocation3], 1
    %8 = vsyncpa %s7, 0
    %9 = vsyncpa [#allocation4], 0
    %s10 = scalar_lea.sflag [#allocation4], 1
    %11 = vsyncpa %s10, 0
    loop: start=0, step=1, limit=4
    $region2: #{tpu_custom_call.1} parent=1 // loop_pre_header
      _
    $region3: #{tpu_custom_call.1} parent=1 // loop_header
      %s13 = sphi 0, %s17
      %p14 = scmp.ge.s32.totalorder %s13, 4
      %s23 = sphi 0, %s25
      %s26 = sphi 0, %s23
      %s27 = sphi 0, %s26
      %s43 = sphi 0, %s27
      %s49 = sphi 0, %s51
      %s52 = sphi 0, %s49
      %s53 = sphi 0, %s52
      %s69 = sphi 0, %s53
    $region4: #{tpu_custom_call.1} parent=1 // loop_header_branch
      %16 = sbr.rel (%p14) target = $region8
    $region5: #{tpu_custom_call.1} parent=1 // loop_body
      %s18 = ssub.s32 %s13, 1
      %s19 = ssub.s32 %s13, 2
      %s20 = sadd.s32 %s13, 1
      %s21 = ssub.s32 %s13, %s20
      %p22 = scmp.eq.s32.totalorder %s21, 0
      %s24 = sadd.s32 %s23, 1
      %s25 = scalar_select %p22, %s23, %s24
      %p28 = pneg %p22
      %p29 = scmp.eq.s32.totalorder %s13, 1
      %p30 = por %p28, %p29
      %p31 = scmp.ne.s32.totalorder %s23, %s26
      %p32 = scmp.eq.s32.totalorder %s13, 0
      %p33 = por %p31, %p32
      %p34 = scmp.ne.s32.totalorder %s23, %s26
      %p35 = scmp.eq.s32.totalorder %s18, 1
      %p36 = por %p34, %p35
      %p37 = scmp.ne.s32.totalorder %s26, %s27
      %p38 = scmp.eq.s32.totalorder %s18, 0
      %p39 = por %p37, %p38
      %p40 = scmp.ne.s32.totalorder %s26, %s27
      %p41 = scmp.eq.s32.totalorder %s19, 1
      %p42 = por %p40, %p41
      %p44 = scmp.ne.s32.totalorder %s27, %s43
      %p45 = scmp.eq.s32.totalorder %s19, 0
      %p46 = por %p44, %p45
      %s47 = ssub.s32 %s13, %s20
      %p48 = scmp.eq.s32.totalorder %s47, 0
      %s50 = sadd.s32 %s49, 1
      %s51 = scalar_select %p48, %s49, %s50
      %p54 = pneg %p48
      %p55 = scmp.eq.s32.totalorder %s13, 1
      %p56 = por %p54, %p55
      %p57 = scmp.ne.s32.totalorder %s49, %s52
      %p58 = scmp.eq.s32.totalorder %s13, 0
      %p59 = por %p57, %p58
      %p60 = scmp.ne.s32.totalorder %s49, %s52
      %p61 = scmp.eq.s32.totalorder %s18, 1
      %p62 = por %p60, %p61
      %p63 = scmp.ne.s32.totalorder %s52, %s53
      %p64 = scmp.eq.s32.totalorder %s18, 0
      %p65 = por %p63, %p64
      %p66 = scmp.ne.s32.totalorder %s52, %s53
      %p67 = scmp.eq.s32.totalorder %s19, 1
      %p68 = por %p66, %p67
      %p70 = scmp.ne.s32.totalorder %s53, %s69
      %p71 = scmp.eq.s32.totalorder %s19, 0
      %p72 = por %p70, %p71
      %p73 = scmp.le.s32.totalorder 1, %s13
      %p74 = scmp.lt.s32.totalorder %s13, 3
      %p75 = pnand %p73, %p74
      %p76 = pneg %p75
      // Predicated region
      $region9: #{tpu_custom_call.1} parent=5 // pred_check
        _
      $region10: #{tpu_custom_call.1} parent=5 // pred_check_branch
        %78 = sbr.rel (%p75) target = $region12
      $region11: #{tpu_custom_call.1} parent=5 // pred_region
        %s79 = ssub.s32 %s13, 1
      $region12: #{tpu_custom_call.1} parent=5 // pred_fallthru
        _
      %p80 = scmp.lt.s32.totalorder %s13, 2
      // Predicated region
      $region13: #{tpu_custom_call.1} parent=5 // pred_check
        %p81 = pneg %p80
      $region14: #{tpu_custom_call.1} parent=5 // pred_check_branch
        %83 = sbr.rel (%p81) target = $region16
      $region15: #{tpu_custom_call.1} parent=5 // pred_region
        // Predicated region
        $region17: #{tpu_custom_call.1} parent=15 // pred_check
          %p84 = pneg %p33
        $region18: #{tpu_custom_call.1} parent=15 // pred_check_branch
          %86 = sbr.rel (%p84) target = $region20
        $region19: #{tpu_custom_call.1} parent=15 // pred_region
          %s87 = sand.u32 %s23, 1
          %s88 = scalar_lea.sflag [#allocation3], %s87
          %s89 = sand.u32 %s23, 1
          %s90 = smul.addr %s89, 384
          %s91 = scalar_lea.vmem [#allocation2], %s90
          %s92 = smul.u32 48, %s13
          %s94 = ssub.s32 6144, 6144
          %95 = vsyncadd %s88, %s94
          %s96 = smul.addr %s92, 128
          %s97 = scalar_lea.hbm %s0, %s96
          %s98 = sshll.u32 %s91, 4
          %s99 = int_to_ptr.vmem [resolvable:$true] %s98
          %104 = dma.hbm_to_vmem [thread:$0]  %s97, 6144, %s99, %s88, 128, 128, 8
        $region20: #{tpu_custom_call.1} parent=15 // pred_fallthru
          _
      $region16: #{tpu_custom_call.1} parent=5 // pred_fallthru
        _
      %p105 = scmp.le.s32.totalorder 1, %s13
      %p106 = scmp.lt.s32.totalorder %s13, 3
      %p107 = pnand %p105, %p106
      %p108 = pneg %p107
      // Predicated region
      $region21: #{tpu_custom_call.1} parent=5 // pred_check
        _
      $region22: #{tpu_custom_call.1} parent=5 // pred_check_branch
        %110 = sbr.rel (%p107) target = $region24
      $region23: #{tpu_custom_call.1} parent=5 // pred_region
        %s111 = ssub.s32 %s13, 1
        %s112 = sand.u32 %s26, 1
        %s113 = scalar_lea.sflag [#allocation3], %s112
        %s114 = sand.u32 %s26, 1
        %s115 = smul.addr %s114, 384
        %s116 = scalar_lea.vmem [#allocation2], %s115
        // Predicated region
        $region25: #{tpu_custom_call.1} parent=23 // pred_check
          %p117 = pneg %p39
        $region26: #{tpu_custom_call.1} parent=23 // pred_check_branch
          %119 = sbr.rel (%p117) target = $region28
        $region27: #{tpu_custom_call.1} parent=23 // pred_region
          %120 = dma.done %s113, 6144
        $region28: #{tpu_custom_call.1} parent=23 // pred_fallthru
          _
        %s121 = sand.u32 %s26, 1
        %s122 = scalar_lea.sflag [#allocation3], %s121
        %s123 = sand.u32 %s26, 1
        %s124 = smul.addr %s123, 384
        %s125 = scalar_lea.vmem [#allocation2], %s124
        %p126 = pneg %p39
        %p127 = pneg %p36
        %p128 = pneg %p65
        %p129 = pneg %p62
        %s130 = sand.u32 %s52, 1
        %s131 = scalar_lea.sflag [#allocation4], %s130
        %s132 = sand.u32 %s52, 1
        %s133 = smul.addr %s132, 8064
        %s134 = scalar_lea.vmem [#allocation5], %s133
        %s135 = smul.u32 48, %s18
        %s136 = smul.u32 48, %s18
        loop: start=0, step=1, limit=12
        $region29: #{tpu_custom_call.1} parent=23 // loop_pre_header
          _
        $region30: #{tpu_custom_call.1} parent=23 // loop_header
          %s138 = sphi 0, %s142
          %p139 = scmp.ge.s32.totalorder %s138, 12
        $region31: #{tpu_custom_call.1} parent=23 // loop_header_branch
          %141 = sbr.rel (%p139) target = $region35
        $region32: #{tpu_custom_call.1} parent=23 // loop_body
          %s143 = smul.u32 %s138, 32
          %s144 = scalar_lea.vmem %s116, %s143 [#allocation2]
          %v145 = vld [vmem:[%s144] sm:$0xff]
          %v146 = vld [vmem:[%s144 + $0x8] sm:$0xff]
          %v147 = vld [vmem:[%s144 + $0x10] sm:$0xff]
          %v148 = vld [vmem:[%s144 + $0x18] sm:$0xff]
          %s149 = scalar_lea.vmem %s134, %s143 [#allocation5]
          %150 = vst [vmem:[%s149] sm:$0xff] %v145
          %151 = vst [vmem:[%s149 + $0x8] sm:$0xff] %v146
          %152 = vst [vmem:[%s149 + $0x10] sm:$0xff] %v147
          %153 = vst [vmem:[%s149 + $0x18] sm:$0xff] %v148
          %v154 = vand.u32 2147483647, %v145
          %vm155 = vcmp.le.f32.partialorder %v154, 0.7853982
          %vm156 = vcmp.lt.s32.totalorder %v145, 0
          %v157 = vand.u32 %v145, 2139095040
          %v158 = vshrl.u32 %v157, 23
          %v159 = vsub.s32 %v158, 127
          %v160 = vand.u32 2147483647, %v145
          %v161 = vand.u32 %v160, 8388607
          %v162 = vor.u32 %v161, 8388608
          %v163 = vsub.s32 0, %v162
          %v164 = vadd.s32 %v159, 1
          %vm165 = vcmp.gt.s32.totalorder %v164, 0
          %v166 = vsel %vm165, %v164, 0
          %v167 = vshrl.u32 %v166, 5
          %v168 = vand.u32 %v166, 31
          %v169 = vsub.s32 32, %v168
          %v170 = vshrl.u32 683565275, %v169
          %v171 = vshll.u32 683565275, %v168
          %v172 = vshrl.u32 2475754826, %v169
          %v173 = vor.u32 %v171, %v172
          %v174 = vshll.u32 2475754826, %v168
          %v175 = vshrl.u32 2131351028, %v169
          %v176 = vor.u32 %v174, %v175
          %v177 = vshll.u32 2131351028, %v168
          %v178 = vshrl.u32 2102212464, %v169
          %v179 = vor.u32 %v177, %v178
          %v180 = vshll.u32 2102212464, %v168
          %v181 = vshrl.u32 920167782, %v169
          %v182 = vor.u32 %v180, %v181
          %v183 = vshll.u32 920167782, %v168
          %v184 = vshrl.u32 1326507024, %v169
          %v185 = vor.u32 %v183, %v184
          %vm186 = vcmp.lt.s32.totalorder %v167, 1
          %vm187 = vcmp.lt.s32.totalorder %v167, 2
          %vm188 = vcmp.lt.s32.totalorder %v167, 3
          %vm189 = vcmp.lt.s32.totalorder %v167, 4
          %v190 = vsel %vm186, %v170, %v173
          %v191 = vsel %vm189, %v179, 2102212464
          %v192 = vsel %vm188, %v176, %v191
          %v193 = vsel %vm187, %v190, %v192
          %v194 = vsel %vm186, %v173, %v176
          %v195 = vsel %vm189, %v182, 920167782
          %v196 = vsel %vm188, %v179, %v195
          %v197 = vsel %vm187, %v194, %v196
          %v198 = vsel %vm186, %v176, %v179
          %v199 = vsel %vm189, %v185, 1326507024
          %v200 = vsel %vm188, %v182, %v199
          %v201 = vsel %vm187, %v198, %v200
          %v202 = vshll.u32 %v162, 8
          %v203 = vmul.u32.u64.compose %v202, %v201
          %v204 = vextract.low.u32 %v203
          %v205 = vextract.high.u32 %v203
          %v206 = vmul.u32.u64.compose %v202, %v197
          %v207 = vextract.low.u32 %v206
          %v208 = vextract.high.u32 %v206
          %v209 = vmul.u32 %v202, %v193
          %v210 = vadd.s32 %v205, %v207
          %vm211 = vc.u32 %v205, %v207
          %v212 = vadd.s32 %v208, 1
          %v213 = vsel %vm211, %v212, %v208
          %v214 = vadd.s32 %v209, %v213
          %v215 = vadd.s32 %v214, 536870912
          %v216 = vshrl.u32 %v215, 30
          %v217 = vshll.u32 %v216, 30
          %v218 = vsub.s32 %v214, %v217
          %vm219 = vcmp.lt.s32.totalorder %v218, 0
          %v220 = vsub.s32 0, %v218
          %v221 = vsel %vm219, %v220, %v218
          %v222 = vclz %v221
          %v223 = vsub.s32 %v222, 2
          %vm224 = vcmp.gt.s32.totalorder 0, %v223
          %v225 = vsel %vm224, 0, %v223
          %v226 = vsub.s32 32, %v225
          %v227 = vshll.u32 %v218, %v225
          %v228 = vshrl.u32 %v210, %v226
          %v229 = vor.u32 %v227, %v228
          %v230 = vsub.s32 4294967266, %v225
          %v231 = vadd.s32 %v230, 127
          %v232 = vshll.u32 %v231, 23
          %v233 = vor.u32 4788187, %v232
          %v234 = vand.u32 2147483647, %v233
          %v236 = vcvt.s32.f32 %v229
          %v237 = vmul.f32 %v236, %v234
          %v238 = vxor.u32 %v237, 2147483648
          %v239 = vsel %vm156, %v238, %v237
          %v240 = vsub.s32 4, %v216
          %v241 = vsel %vm156, %v240, %v216
          %v242 = vsel %vm155, %v145, %v239
          %v243 = vsel %vm155, 0, %v241
          %v244 = vcosq.f32.pop %v242
          %v245 = vsinq.f32.pop %v242
          %vm246 = vweird.f32 %v145
          %v247 = vadd.s32 %v243, 3
          %v248 = vand.u32 %v247, 3
          %vm249 = vcmp.lt.s32.totalorder %v248, 2
          %vm250 = vcmp.eq.s32.totalorder %v248, 0
          %v251 = vxor.u32 %v245, 2147483648
          %v252 = vsel %vm250, %v244, %v251
          %vm253 = vcmp.eq.s32.totalorder %v248, 2
          %v254 = vxor.u32 %v244, 2147483648
          %v255 = vsel %vm253, %v254, %v245
          %v256 = vsel %vm249, %v252, %v255
          %v257 = vsel %vm246, nan, %v256
          %v258 = vand.u32 2147483647, %v146
          %vm259 = vcmp.le.f32.partialorder %v258, 0.7853982
          %vm260 = vcmp.lt.s32.totalorder %v146, 0
          %v261 = vand.u32 %v146, 2139095040
          %v262 = vshrl.u32 %v261, 23
          %v263 = vsub.s32 %v262, 127
          %v264 = vand.u32 2147483647, %v146
          %v265 = vand.u32 %v264, 8388607
          %v266 = vor.u32 %v265, 8388608
          %v267 = vsub.s32 0, %v266
          %v268 = vadd.s32 %v263, 1
          %vm269 = vcmp.gt.s32.totalorder %v268, 0
          %v270 = vsel %vm269, %v268, 0
          %v271 = vshrl.u32 %v270, 5
          %v272 = vand.u32 %v270, 31
          %v273 = vsub.s32 32, %v272
          %v274 = vshrl.u32 683565275, %v273
          %v275 = vshll.u32 683565275, %v272
          %v276 = vshrl.u32 2475754826, %v273
          %v277 = vor.u32 %v275, %v276
          %v278 = vshll.u32 2475754826, %v272
          %v279 = vshrl.u32 2131351028, %v273
          %v280 = vor.u32 %v278, %v279
          %v281 = vshll.u32 2131351028, %v272
          %v282 = vshrl.u32 2102212464, %v273
          %v283 = vor.u32 %v281, %v282
          %v284 = vshll.u32 2102212464, %v272
          %v285 = vshrl.u32 920167782, %v273
          %v286 = vor.u32 %v284, %v285
          %v287 = vshll.u32 920167782, %v272
          %v288 = vshrl.u32 1326507024, %v273
          %v289 = vor.u32 %v287, %v288
          %vm290 = vcmp.lt.s32.totalorder %v271, 1
          %vm291 = vcmp.lt.s32.totalorder %v271, 2
          %vm292 = vcmp.lt.s32.totalorder %v271, 3
          %vm293 = vcmp.lt.s32.totalorder %v271, 4
          %v294 = vsel %vm290, %v274, %v277
          %v295 = vsel %vm293, %v283, 2102212464
          %v296 = vsel %vm292, %v280, %v295
          %v297 = vsel %vm291, %v294, %v296
          %v298 = vsel %vm290, %v277, %v280
          %v299 = vsel %vm293, %v286, 920167782
          %v300 = vsel %vm292, %v283, %v299
          %v301 = vsel %vm291, %v298, %v300
          %v302 = vsel %vm290, %v280, %v283
          %v303 = vsel %vm293, %v289, 1326507024
          %v304 = vsel %vm292, %v286, %v303
          %v305 = vsel %vm291, %v302, %v304
          %v306 = vshll.u32 %v266, 8
          %v307 = vmul.u32.u64.compose %v306, %v305
          %v308 = vextract.low.u32 %v307
          %v309 = vextract.high.u32 %v307
          %v310 = vmul.u32.u64.compose %v306, %v301
          %v311 = vextract.low.u32 %v310
          %v312 = vextract.high.u32 %v310
          %v313 = vmul.u32 %v306, %v297
          %v314 = vadd.s32 %v309, %v311
          %vm315 = vc.u32 %v309, %v311
          %v316 = vadd.s32 %v312, 1
          %v317 = vsel %vm315, %v316, %v312
          %v318 = vadd.s32 %v313, %v317
          %v319 = vadd.s32 %v318, 536870912
          %v320 = vshrl.u32 %v319, 30
          %v321 = vshll.u32 %v320, 30
          %v322 = vsub.s32 %v318, %v321
          %vm323 = vcmp.lt.s32.totalorder %v322, 0
          %v324 = vsub.s32 0, %v322
          %v325 = vsel %vm323, %v324, %v322
          %v326 = vclz %v325
          %v327 = vsub.s32 %v326, 2
          %vm328 = vcmp.gt.s32.totalorder 0, %v327
          %v329 = vsel %vm328, 0, %v327
          %v330 = vsub.s32 32, %v329
          %v331 = vshll.u32 %v322, %v329
          %v332 = vshrl.u32 %v314, %v330
          %v333 = vor.u32 %v331, %v332
          %v334 = vsub.s32 4294967266, %v329
          %v335 = vadd.s32 %v334, 127
          %v336 = vshll.u32 %v335, 23
          %v337 = vor.u32 4788187, %v336
          %v338 = vand.u32 2147483647, %v337
          %v340 = vcvt.s32.f32 %v333
          %v341 = vmul.f32 %v340, %v338
          %v342 = vxor.u32 %v341, 2147483648
          %v343 = vsel %vm260, %v342, %v341
          %v344 = vsub.s32 4, %v320
          %v345 = vsel %vm260, %v344, %v320
          %v346 = vsel %vm259, %v146, %v343
          %v347 = vsel %vm259, 0, %v345
          %v348 = vcosq.f32.pop %v346
          %v349 = vsinq.f32.pop %v346
          %vm350 = vweird.f32 %v146
          %v351 = vadd.s32 %v347, 3
          %v352 = vand.u32 %v351, 3
          %vm353 = vcmp.lt.s32.totalorder %v352, 2
          %vm354 = vcmp.eq.s32.totalorder %v352, 0
          %v355 = vxor.u32 %v349, 2147483648
          %v356 = vsel %vm354, %v348, %v355
          %vm357 = vcmp.eq.s32.totalorder %v352, 2
          %v358 = vxor.u32 %v348, 2147483648
          %v359 = vsel %vm357, %v358, %v349
          %v360 = vsel %vm353, %v356, %v359
          %v361 = vsel %vm350, nan, %v360
          %v362 = vand.u32 2147483647, %v147
          %vm363 = vcmp.le.f32.partialorder %v362, 0.7853982
          %vm364 = vcmp.lt.s32.totalorder %v147, 0
          %v365 = vand.u32 %v147, 2139095040
          %v366 = vshrl.u32 %v365, 23
          %v367 = vsub.s32 %v366, 127
          %v368 = vand.u32 2147483647, %v147
          %v369 = vand.u32 %v368, 8388607
          %v370 = vor.u32 %v369, 8388608
          %v371 = vsub.s32 0, %v370
          %v372 = vadd.s32 %v367, 1
          %vm373 = vcmp.gt.s32.totalorder %v372, 0
          %v374 = vsel %vm373, %v372, 0
          %v375 = vshrl.u32 %v374, 5
          %v376 = vand.u32 %v374, 31
          %v377 = vsub.s32 32, %v376
          %v378 = vshrl.u32 683565275, %v377
          %v379 = vshll.u32 683565275, %v376
          %v380 = vshrl.u32 2475754826, %v377
          %v381 = vor.u32 %v379, %v380
          %v382 = vshll.u32 2475754826, %v376
          %v383 = vshrl.u32 2131351028, %v377
          %v384 = vor.u32 %v382, %v383
          %v385 = vshll.u32 2131351028, %v376
          %v386 = vshrl.u32 2102212464, %v377
          %v387 = vor.u32 %v385, %v386
          %v388 = vshll.u32 2102212464, %v376
          %v389 = vshrl.u32 920167782, %v377
          %v390 = vor.u32 %v388, %v389
          %v391 = vshll.u32 920167782, %v376
          %v392 = vshrl.u32 1326507024, %v377
          %v393 = vor.u32 %v391, %v392
          %vm394 = vcmp.lt.s32.totalorder %v375, 1
          %vm395 = vcmp.lt.s32.totalorder %v375, 2
          %vm396 = vcmp.lt.s32.totalorder %v375, 3
          %vm397 = vcmp.lt.s32.totalorder %v375, 4
          %v398 = vsel %vm394, %v378, %v381
          %v399 = vsel %vm397, %v387, 2102212464
          %v400 = vsel %vm396, %v384, %v399
          %v401 = vsel %vm395, %v398, %v400
          %v402 = vsel %vm394, %v381, %v384
          %v403 = vsel %vm397, %v390, 920167782
          %v404 = vsel %vm396, %v387, %v403
          %v405 = vsel %vm395, %v402, %v404
          %v406 = vsel %vm394, %v384, %v387
          %v407 = vsel %vm397, %v393, 1326507024
          %v408 = vsel %vm396, %v390, %v407
          %v409 = vsel %vm395, %v406, %v408
          %v410 = vshll.u32 %v370, 8
          %v411 = vmul.u32.u64.compose %v410, %v409
          %v412 = vextract.low.u32 %v411
          %v413 = vextract.high.u32 %v411
          %v414 = vmul.u32.u64.compose %v410, %v405
          %v415 = vextract.low.u32 %v414
          %v416 = vextract.high.u32 %v414
          %v417 = vmul.u32 %v410, %v401
          %v418 = vadd.s32 %v413, %v415
          %vm419 = vc.u32 %v413, %v415
          %v420 = vadd.s32 %v416, 1
          %v421 = vsel %vm419, %v420, %v416
          %v422 = vadd.s32 %v417, %v421
          %v423 = vadd.s32 %v422, 536870912
          %v424 = vshrl.u32 %v423, 30
          %v425 = vshll.u32 %v424, 30
          %v426 = vsub.s32 %v422, %v425
          %vm427 = vcmp.lt.s32.totalorder %v426, 0
          %v428 = vsub.s32 0, %v426
          %v429 = vsel %vm427, %v428, %v426
          %v430 = vclz %v429
          %v431 = vsub.s32 %v430, 2
          %vm432 = vcmp.gt.s32.totalorder 0, %v431
          %v433 = vsel %vm432, 0, %v431
          %v434 = vsub.s32 32, %v433
          %v435 = vshll.u32 %v426, %v433
          %v436 = vshrl.u32 %v418, %v434
          %v437 = vor.u32 %v435, %v436
          %v438 = vsub.s32 4294967266, %v433
          %v439 = vadd.s32 %v438, 127
          %v440 = vshll.u32 %v439, 23
          %v441 = vor.u32 4788187, %v440
          %v442 = vand.u32 2147483647, %v441
          %v444 = vcvt.s32.f32 %v437
          %v445 = vmul.f32 %v444, %v442
          %v446 = vxor.u32 %v445, 2147483648
          %v447 = vsel %vm364, %v446, %v445
          %v448 = vsub.s32 4, %v424
          %v449 = vsel %vm364, %v448, %v424
          %v450 = vsel %vm363, %v147, %v447
          %v451 = vsel %vm363, 0, %v449
          %v452 = vcosq.f32.pop %v450
          %v453 = vsinq.f32.pop %v450
          %vm454 = vweird.f32 %v147
          %v455 = vadd.s32 %v451, 3
          %v456 = vand.u32 %v455, 3
          %vm457 = vcmp.lt.s32.totalorder %v456, 2
          %vm458 = vcmp.eq.s32.totalorder %v456, 0
          %v459 = vxor.u32 %v453, 2147483648
          %v460 = vsel %vm458, %v452, %v459
          %vm461 = vcmp.eq.s32.totalorder %v456, 2
          %v462 = vxor.u32 %v452, 2147483648
          %v463 = vsel %vm461, %v462, %v453
          %v464 = vsel %vm457, %v460, %v463
          %v465 = vsel %vm454, nan, %v464
          %v466 = vand.u32 2147483647, %v148
          %vm467 = vcmp.le.f32.partialorder %v466, 0.7853982
          %vm468 = vcmp.lt.s32.totalorder %v148, 0
          %v469 = vand.u32 %v148, 2139095040
          %v470 = vshrl.u32 %v469, 23
          %v471 = vsub.s32 %v470, 127
          %v472 = vand.u32 2147483647, %v148
          %v473 = vand.u32 %v472, 8388607
          %v474 = vor.u32 %v473, 8388608
          %v475 = vsub.s32 0, %v474
          %v476 = vadd.s32 %v471, 1
          %vm477 = vcmp.gt.s32.totalorder %v476, 0
          %v478 = vsel %vm477, %v476, 0
          %v479 = vshrl.u32 %v478, 5
          %v480 = vand.u32 %v478, 31
          %v481 = vsub.s32 32, %v480
          %v482 = vshrl.u32 683565275, %v481
          %v483 = vshll.u32 683565275, %v480
          %v484 = vshrl.u32 2475754826, %v481
          %v485 = vor.u32 %v483, %v484
          %v486 = vshll.u32 2475754826, %v480
          %v487 = vshrl.u32 2131351028, %v481
          %v488 = vor.u32 %v486, %v487
          %v489 = vshll.u32 2131351028, %v480
          %v490 = vshrl.u32 2102212464, %v481
          %v491 = vor.u32 %v489, %v490
          %v492 = vshll.u32 2102212464, %v480
          %v493 = vshrl.u32 920167782, %v481
          %v494 = vor.u32 %v492, %v493
          %v495 = vshll.u32 920167782, %v480
          %v496 = vshrl.u32 1326507024, %v481
          %v497 = vor.u32 %v495, %v496
          %vm498 = vcmp.lt.s32.totalorder %v479, 1
          %vm499 = vcmp.lt.s32.totalorder %v479, 2
          %vm500 = vcmp.lt.s32.totalorder %v479, 3
          %vm501 = vcmp.lt.s32.totalorder %v479, 4
          %v502 = vsel %vm498, %v482, %v485
          %v503 = vsel %vm501, %v491, 2102212464
          %v504 = vsel %vm500, %v488, %v503
          %v505 = vsel %vm499, %v502, %v504
          %v506 = vsel %vm498, %v485, %v488
          %v507 = vsel %vm501, %v494, 920167782
          %v508 = vsel %vm500, %v491, %v507
          %v509 = vsel %vm499, %v506, %v508
          %v510 = vsel %vm498, %v488, %v491
          %v511 = vsel %vm501, %v497, 1326507024
          %v512 = vsel %vm500, %v494, %v511
          %v513 = vsel %vm499, %v510, %v512
          %v514 = vshll.u32 %v474, 8
          %v515 = vmul.u32.u64.compose %v514, %v513
          %v516 = vextract.low.u32 %v515
          %v517 = vextract.high.u32 %v515
          %v518 = vmul.u32.u64.compose %v514, %v509
          %v519 = vextract.low.u32 %v518
          %v520 = vextract.high.u32 %v518
          %v521 = vmul.u32 %v514, %v505
          %v522 = vadd.s32 %v517, %v519
          %vm523 = vc.u32 %v517, %v519
          %v524 = vadd.s32 %v520, 1
          %v525 = vsel %vm523, %v524, %v520
          %v526 = vadd.s32 %v521, %v525
          %v527 = vadd.s32 %v526, 536870912
          %v528 = vshrl.u32 %v527, 30
          %v529 = vshll.u32 %v528, 30
          %v530 = vsub.s32 %v526, %v529
          %vm531 = vcmp.lt.s32.totalorder %v530, 0
          %v532 = vsub.s32 0, %v530
          %v533 = vsel %vm531, %v532, %v530
          %v534 = vclz %v533
          %v535 = vsub.s32 %v534, 2
          %vm536 = vcmp.gt.s32.totalorder 0, %v535
          %v537 = vsel %vm536, 0, %v535
          %v538 = vsub.s32 32, %v537
          %v539 = vshll.u32 %v530, %v537
          %v540 = vshrl.u32 %v522, %v538
          %v541 = vor.u32 %v539, %v540
          %v542 = vsub.s32 4294967266, %v537
          %v543 = vadd.s32 %v542, 127
          %v544 = vshll.u32 %v543, 23
          %v545 = vor.u32 4788187, %v544
          %v546 = vand.u32 2147483647, %v545
          %v548 = vcvt.s32.f32 %v541
          %v549 = vmul.f32 %v548, %v546
          %v550 = vxor.u32 %v549, 2147483648
          %v551 = vsel %vm468, %v550, %v549
          %v552 = vsub.s32 4, %v528
          %v553 = vsel %vm468, %v552, %v528
          %v554 = vsel %vm467, %v148, %v551
          %v555 = vsel %vm467, 0, %v553
          %v556 = vcosq.f32.pop %v554
          %v557 = vsinq.f32.pop %v554
          %vm558 = vweird.f32 %v148
          %v559 = vadd.s32 %v555, 3
          %v560 = vand.u32 %v559, 3
          %vm561 = vcmp.lt.s32.totalorder %v560, 2
          %vm562 = vcmp.eq.s32.totalorder %v560, 0
          %v563 = vxor.u32 %v557, 2147483648
          %v564 = vsel %vm562, %v556, %v563
          %vm565 = vcmp.eq.s32.totalorder %v560, 2
          %v566 = vxor.u32 %v556, 2147483648
          %v567 = vsel %vm565, %v566, %v557
          %v568 = vsel %vm561, %v564, %v567
          %v569 = vsel %vm558, nan, %v568
          %v570 = vand.u32 2147483647, %v145
          %vm571 = vcmp.le.f32.partialorder %v570, 0.7853982
          %vm572 = vcmp.lt.s32.totalorder %v145, 0
          %v573 = vand.u32 %v145, 2139095040
          %v574 = vshrl.u32 %v573, 23
          %v575 = vsub.s32 %v574, 127
          %v576 = vand.u32 2147483647, %v145
          %v577 = vand.u32 %v576, 8388607
          %v578 = vor.u32 %v577, 8388608
          %v579 = vsub.s32 0, %v578
          %v580 = vadd.s32 %v575, 1
          %vm581 = vcmp.gt.s32.totalorder %v580, 0
          %v582 = vsel %vm581, %v580, 0
          %v583 = vshrl.u32 %v582, 5
          %v584 = vand.u32 %v582, 31
          %v585 = vsub.s32 32, %v584
          %v586 = vshrl.u32 683565275, %v585
          %v587 = vshll.u32 683565275, %v584
          %v588 = vshrl.u32 2475754826, %v585
          %v589 = vor.u32 %v587, %v588
          %v590 = vshll.u32 2475754826, %v584
          %v591 = vshrl.u32 2131351028, %v585
          %v592 = vor.u32 %v590, %v591
          %v593 = vshll.u32 2131351028, %v584
          %v594 = vshrl.u32 2102212464, %v585
          %v595 = vor.u32 %v593, %v594
          %v596 = vshll.u32 2102212464, %v584
          %v597 = vshrl.u32 920167782, %v585
          %v598 = vor.u32 %v596, %v597
          %v599 = vshll.u32 920167782, %v584
          %v600 = vshrl.u32 1326507024, %v585
          %v601 = vor.u32 %v599, %v600
          %vm602 = vcmp.lt.s32.totalorder %v583, 1
          %vm603 = vcmp.lt.s32.totalorder %v583, 2
          %vm604 = vcmp.lt.s32.totalorder %v583, 3
          %vm605 = vcmp.lt.s32.totalorder %v583, 4
          %v606 = vsel %vm602, %v586, %v589
          %v607 = vsel %vm605, %v595, 2102212464
          %v608 = vsel %vm604, %v592, %v607
          %v609 = vsel %vm603, %v606, %v608
          %v610 = vsel %vm602, %v589, %v592
          %v611 = vsel %vm605, %v598, 920167782
          %v612 = vsel %vm604, %v595, %v611
          %v613 = vsel %vm603, %v610, %v612
          %v614 = vsel %vm602, %v592, %v595
          %v615 = vsel %vm605, %v601, 1326507024
          %v616 = vsel %vm604, %v598, %v615
          %v617 = vsel %vm603, %v614, %v616
          %v618 = vshll.u32 %v578, 8
          %v619 = vmul.u32.u64.compose %v618, %v617
          %v620 = vextract.low.u32 %v619
          %v621 = vextract.high.u32 %v619
          %v622 = vmul.u32.u64.compose %v618, %v613
          %v623 = vextract.low.u32 %v622
          %v624 = vextract.high.u32 %v622
          %v625 = vmul.u32 %v618, %v609
          %v626 = vadd.s32 %v621, %v623
          %vm627 = vc.u32 %v621, %v623
          %v628 = vadd.s32 %v624, 1
          %v629 = vsel %vm627, %v628, %v624
          %v630 = vadd.s32 %v625, %v629
          %v631 = vadd.s32 %v630, 536870912
          %v632 = vshrl.u32 %v631, 30
          %v633 = vshll.u32 %v632, 30
          %v634 = vsub.s32 %v630, %v633
          %vm635 = vcmp.lt.s32.totalorder %v634, 0
          %v636 = vsub.s32 0, %v634
          %v637 = vsel %vm635, %v636, %v634
          %v638 = vclz %v637
          %v639 = vsub.s32 %v638, 2
          %vm640 = vcmp.gt.s32.totalorder 0, %v639
          %v641 = vsel %vm640, 0, %v639
          %v642 = vsub.s32 32, %v641
          %v643 = vshll.u32 %v634, %v641
          %v644 = vshrl.u32 %v626, %v642
          %v645 = vor.u32 %v643, %v644
          %v646 = vsub.s32 4294967266, %v641
          %v647 = vadd.s32 %v646, 127
          %v648 = vshll.u32 %v647, 23
          %v649 = vor.u32 4788187, %v648
          %v650 = vand.u32 2147483647, %v649
          %v652 = vcvt.s32.f32 %v645
          %v653 = vmul.f32 %v652, %v650
          %v654 = vxor.u32 %v653, 2147483648
          %v655 = vsel %vm572, %v654, %v653
          %v656 = vsub.s32 4, %v632
          %v657 = vsel %vm572, %v656, %v632
          %v658 = vsel %vm571, %v145, %v655
          %v659 = vsel %vm571, 0, %v657
          %v660 = vcosq.f32.pop %v658
          %v661 = vsinq.f32.pop %v658
          %vm662 = vweird.f32 %v145
          %v663 = vand.u32 %v659, 3
          %vm664 = vcmp.lt.s32.totalorder %v663, 2
          %vm665 = vcmp.eq.s32.totalorder %v663, 0
          %v666 = vxor.u32 %v661, 2147483648
          %v667 = vsel %vm665, %v660, %v666
          %vm668 = vcmp.eq.s32.totalorder %v663, 2
          %v669 = vxor.u32 %v660, 2147483648
          %v670 = vsel %vm668, %v669, %v661
          %v671 = vsel %vm664, %v667, %v670
          %v672 = vsel %vm662, nan, %v671
          %v673 = vand.u32 2147483647, %v146
          %vm674 = vcmp.le.f32.partialorder %v673, 0.7853982
          %vm675 = vcmp.lt.s32.totalorder %v146, 0
          %v676 = vand.u32 %v146, 2139095040
          %v677 = vshrl.u32 %v676, 23
          %v678 = vsub.s32 %v677, 127
          %v679 = vand.u32 2147483647, %v146
          %v680 = vand.u32 %v679, 8388607
          %v681 = vor.u32 %v680, 8388608
          %v682 = vsub.s32 0, %v681
          %v683 = vadd.s32 %v678, 1
          %vm684 = vcmp.gt.s32.totalorder %v683, 0
          %v685 = vsel %vm684, %v683, 0
          %v686 = vshrl.u32 %v685, 5
          %v687 = vand.u32 %v685, 31
          %v688 = vsub.s32 32, %v687
          %v689 = vshrl.u32 683565275, %v688
          %v690 = vshll.u32 683565275, %v687
          %v691 = vshrl.u32 2475754826, %v688
          %v692 = vor.u32 %v690, %v691
          %v693 = vshll.u32 2475754826, %v687
          %v694 = vshrl.u32 2131351028, %v688
          %v695 = vor.u32 %v693, %v694
          %v696 = vshll.u32 2131351028, %v687
          %v697 = vshrl.u32 2102212464, %v688
          %v698 = vor.u32 %v696, %v697
          %v699 = vshll.u32 2102212464, %v687
          %v700 = vshrl.u32 920167782, %v688
          %v701 = vor.u32 %v699, %v700
          %v702 = vshll.u32 920167782, %v687
          %v703 = vshrl.u32 1326507024, %v688
          %v704 = vor.u32 %v702, %v703
          %vm705 = vcmp.lt.s32.totalorder %v686, 1
          %vm706 = vcmp.lt.s32.totalorder %v686, 2
          %vm707 = vcmp.lt.s32.totalorder %v686, 3
          %vm708 = vcmp.lt.s32.totalorder %v686, 4
          %v709 = vsel %vm705, %v689, %v692
          %v710 = vsel %vm708, %v698, 2102212464
          %v711 = vsel %vm707, %v695, %v710
          %v712 = vsel %vm706, %v709, %v711
          %v713 = vsel %vm705, %v692, %v695
          %v714 = vsel %vm708, %v701, 920167782
          %v715 = vsel %vm707, %v698, %v714
          %v716 = vsel %vm706, %v713, %v715
          %v717 = vsel %vm705, %v695, %v698
          %v718 = vsel %vm708, %v704, 1326507024
          %v719 = vsel %vm707, %v701, %v718
          %v720 = vsel %vm706, %v717, %v719
          %v721 = vshll.u32 %v681, 8
          %v722 = vmul.u32.u64.compose %v721, %v720
          %v723 = vextract.low.u32 %v722
          %v724 = vextract.high.u32 %v722
          %v725 = vmul.u32.u64.compose %v721, %v716
          %v726 = vextract.low.u32 %v725
          %v727 = vextract.high.u32 %v725
          %v728 = vmul.u32 %v721, %v712
          %v729 = vadd.s32 %v724, %v726
          %vm730 = vc.u32 %v724, %v726
          %v731 = vadd.s32 %v727, 1
          %v732 = vsel %vm730, %v731, %v727
          %v733 = vadd.s32 %v728, %v732
          %v734 = vadd.s32 %v733, 536870912
          %v735 = vshrl.u32 %v734, 30
          %v736 = vshll.u32 %v735, 30
          %v737 = vsub.s32 %v733, %v736
          %vm738 = vcmp.lt.s32.totalorder %v737, 0
          %v739 = vsub.s32 0, %v737
          %v740 = vsel %vm738, %v739, %v737
          %v741 = vclz %v740
          %v742 = vsub.s32 %v741, 2
          %vm743 = vcmp.gt.s32.totalorder 0, %v742
          %v744 = vsel %vm743, 0, %v742
          %v745 = vsub.s32 32, %v744
          %v746 = vshll.u32 %v737, %v744
          %v747 = vshrl.u32 %v729, %v745
          %v748 = vor.u32 %v746, %v747
          %v749 = vsub.s32 4294967266, %v744
          %v750 = vadd.s32 %v749, 127
          %v751 = vshll.u32 %v750, 23
          %v752 = vor.u32 4788187, %v751
          %v753 = vand.u32 2147483647, %v752
          %v755 = vcvt.s32.f32 %v748
          %v756 = vmul.f32 %v755, %v753
          %v757 = vxor.u32 %v756, 2147483648
          %v758 = vsel %vm675, %v757, %v756
          %v759 = vsub.s32 4, %v735
          %v760 = vsel %vm675, %v759, %v735
          %v761 = vsel %vm674, %v146, %v758
          %v762 = vsel %vm674, 0, %v760
          %v763 = vcosq.f32.pop %v761
          %v764 = vsinq.f32.pop %v761
          %vm765 = vweird.f32 %v146
          %v766 = vand.u32 %v762, 3
          %vm767 = vcmp.lt.s32.totalorder %v766, 2
          %vm768 = vcmp.eq.s32.totalorder %v766, 0
          %v769 = vxor.u32 %v764, 2147483648
          %v770 = vsel %vm768, %v763, %v769
          %vm771 = vcmp.eq.s32.totalorder %v766, 2
          %v772 = vxor.u32 %v763, 2147483648
          %v773 = vsel %vm771, %v772, %v764
          %v774 = vsel %vm767, %v770, %v773
          %v775 = vsel %vm765, nan, %v774
          %v776 = vand.u32 2147483647, %v147
          %vm777 = vcmp.le.f32.partialorder %v776, 0.7853982
          %vm778 = vcmp.lt.s32.totalorder %v147, 0
          %v779 = vand.u32 %v147, 2139095040
          %v780 = vshrl.u32 %v779, 23
          %v781 = vsub.s32 %v780, 127
          %v782 = vand.u32 2147483647, %v147
          %v783 = vand.u32 %v782, 8388607
          %v784 = vor.u32 %v783, 8388608
          %v785 = vsub.s32 0, %v784
          %v786 = vadd.s32 %v781, 1
          %vm787 = vcmp.gt.s32.totalorder %v786, 0
          %v788 = vsel %vm787, %v786, 0
          %v789 = vshrl.u32 %v788, 5
          %v790 = vand.u32 %v788, 31
          %v791 = vsub.s32 32, %v790
          %v792 = vshrl.u32 683565275, %v791
          %v793 = vshll.u32 683565275, %v790
          %v794 = vshrl.u32 2475754826, %v791
          %v795 = vor.u32 %v793, %v794
          %v796 = vshll.u32 2475754826, %v790
          %v797 = vshrl.u32 2131351028, %v791
          %v798 = vor.u32 %v796, %v797
          %v799 = vshll.u32 2131351028, %v790
          %v800 = vshrl.u32 2102212464, %v791
          %v801 = vor.u32 %v799, %v800
          %v802 = vshll.u32 2102212464, %v790
          %v803 = vshrl.u32 920167782, %v791
          %v804 = vor.u32 %v802, %v803
          %v805 = vshll.u32 920167782, %v790
          %v806 = vshrl.u32 1326507024, %v791
          %v807 = vor.u32 %v805, %v806
          %vm808 = vcmp.lt.s32.totalorder %v789, 1
          %vm809 = vcmp.lt.s32.totalorder %v789, 2
          %vm810 = vcmp.lt.s32.totalorder %v789, 3
          %vm811 = vcmp.lt.s32.totalorder %v789, 4
          %v812 = vsel %vm808, %v792, %v795
          %v813 = vsel %vm811, %v801, 2102212464
          %v814 = vsel %vm810, %v798, %v813
          %v815 = vsel %vm809, %v812, %v814
          %v816 = vsel %vm808, %v795, %v798
          %v817 = vsel %vm811, %v804, 920167782
          %v818 = vsel %vm810, %v801, %v817
          %v819 = vsel %vm809, %v816, %v818
          %v820 = vsel %vm808, %v798, %v801
          %v821 = vsel %vm811, %v807, 1326507024
          %v822 = vsel %vm810, %v804, %v821
          %v823 = vsel %vm809, %v820, %v822
          %v824 = vshll.u32 %v784, 8
          %v825 = vmul.u32.u64.compose %v824, %v823
          %v826 = vextract.low.u32 %v825
          %v827 = vextract.high.u32 %v825
          %v828 = vmul.u32.u64.compose %v824, %v819
          %v829 = vextract.low.u32 %v828
          %v830 = vextract.high.u32 %v828
          %v831 = vmul.u32 %v824, %v815
          %v832 = vadd.s32 %v827, %v829
          %vm833 = vc.u32 %v827, %v829
          %v834 = vadd.s32 %v830, 1
          %v835 = vsel %vm833, %v834, %v830
          %v836 = vadd.s32 %v831, %v835
          %v837 = vadd.s32 %v836, 536870912
          %v838 = vshrl.u32 %v837, 30
          %v839 = vshll.u32 %v838, 30
          %v840 = vsub.s32 %v836, %v839
          %vm841 = vcmp.lt.s32.totalorder %v840, 0
          %v842 = vsub.s32 0, %v840
          %v843 = vsel %vm841, %v842, %v840
          %v844 = vclz %v843
          %v845 = vsub.s32 %v844, 2
          %vm846 = vcmp.gt.s32.totalorder 0, %v845
          %v847 = vsel %vm846, 0, %v845
          %v848 = vsub.s32 32, %v847
          %v849 = vshll.u32 %v840, %v847
          %v850 = vshrl.u32 %v832, %v848
          %v851 = vor.u32 %v849, %v850
          %v852 = vsub.s32 4294967266, %v847
          %v853 = vadd.s32 %v852, 127
          %v854 = vshll.u32 %v853, 23
          %v855 = vor.u32 4788187, %v854
          %v856 = vand.u32 2147483647, %v855
          %v858 = vcvt.s32.f32 %v851
          %v859 = vmul.f32 %v858, %v856
          %v860 = vxor.u32 %v859, 2147483648
          %v861 = vsel %vm778, %v860, %v859
          %v862 = vsub.s32 4, %v838
          %v863 = vsel %vm778, %v862, %v838
          %v864 = vsel %vm777, %v147, %v861
          %v865 = vsel %vm777, 0, %v863
          %v866 = vcosq.f32.pop %v864
          %v867 = vsinq.f32.pop %v864
          %vm868 = vweird.f32 %v147
          %v869 = vand.u32 %v865, 3
          %vm870 = vcmp.lt.s32.totalorder %v869, 2
          %vm871 = vcmp.eq.s32.totalorder %v869, 0
          %v872 = vxor.u32 %v867, 2147483648
          %v873 = vsel %vm871, %v866, %v872
          %vm874 = vcmp.eq.s32.totalorder %v869, 2
          %v875 = vxor.u32 %v866, 2147483648
          %v876 = vsel %vm874, %v875, %v867
          %v877 = vsel %vm870, %v873, %v876
          %v878 = vsel %vm868, nan, %v877
          %v879 = vand.u32 2147483647, %v148
          %vm880 = vcmp.le.f32.partialorder %v879, 0.7853982
          %vm881 = vcmp.lt.s32.totalorder %v148, 0
          %v882 = vand.u32 %v148, 2139095040
          %v883 = vshrl.u32 %v882, 23
          %v884 = vsub.s32 %v883, 127
          %v885 = vand.u32 2147483647, %v148
          %v886 = vand.u32 %v885, 8388607
          %v887 = vor.u32 %v886, 8388608
          %v888 = vsub.s32 0, %v887
          %v889 = vadd.s32 %v884, 1
          %vm890 = vcmp.gt.s32.totalorder %v889, 0
          %v891 = vsel %vm890, %v889, 0
          %v892 = vshrl.u32 %v891, 5
          %v893 = vand.u32 %v891, 31
          %v894 = vsub.s32 32, %v893
          %v895 = vshrl.u32 683565275, %v894
          %v896 = vshll.u32 683565275, %v893
          %v897 = vshrl.u32 2475754826, %v894
          %v898 = vor.u32 %v896, %v897
          %v899 = vshll.u32 2475754826, %v893
          %v900 = vshrl.u32 2131351028, %v894
          %v901 = vor.u32 %v899, %v900
          %v902 = vshll.u32 2131351028, %v893
          %v903 = vshrl.u32 2102212464, %v894
          %v904 = vor.u32 %v902, %v903
          %v905 = vshll.u32 2102212464, %v893
          %v906 = vshrl.u32 920167782, %v894
          %v907 = vor.u32 %v905, %v906
          %v908 = vshll.u32 920167782, %v893
          %v909 = vshrl.u32 1326507024, %v894
          %v910 = vor.u32 %v908, %v909
          %vm911 = vcmp.lt.s32.totalorder %v892, 1
          %vm912 = vcmp.lt.s32.totalorder %v892, 2
          %vm913 = vcmp.lt.s32.totalorder %v892, 3
          %vm914 = vcmp.lt.s32.totalorder %v892, 4
          %v915 = vsel %vm911, %v895, %v898
          %v916 = vsel %vm914, %v904, 2102212464
          %v917 = vsel %vm913, %v901, %v916
          %v918 = vsel %vm912, %v915, %v917
          %v919 = vsel %vm911, %v898, %v901
          %v920 = vsel %vm914, %v907, 920167782
          %v921 = vsel %vm913, %v904, %v920
          %v922 = vsel %vm912, %v919, %v921
          %v923 = vsel %vm911, %v901, %v904
          %v924 = vsel %vm914, %v910, 1326507024
          %v925 = vsel %vm913, %v907, %v924
          %v926 = vsel %vm912, %v923, %v925
          %v927 = vshll.u32 %v887, 8
          %v928 = vmul.u32.u64.compose %v927, %v926
          %v929 = vextract.low.u32 %v928
          %v930 = vextract.high.u32 %v928
          %v931 = vmul.u32.u64.compose %v927, %v922
          %v932 = vextract.low.u32 %v931
          %v933 = vextract.high.u32 %v931
          %v934 = vmul.u32 %v927, %v918
          %v935 = vadd.s32 %v930, %v932
          %vm936 = vc.u32 %v930, %v932
          %v937 = vadd.s32 %v933, 1
          %v938 = vsel %vm936, %v937, %v933
          %v939 = vadd.s32 %v934, %v938
          %v940 = vadd.s32 %v939, 536870912
          %v941 = vshrl.u32 %v940, 30
          %v942 = vshll.u32 %v941, 30
          %v943 = vsub.s32 %v939, %v942
          %vm944 = vcmp.lt.s32.totalorder %v943, 0
          %v945 = vsub.s32 0, %v943
          %v946 = vsel %vm944, %v945, %v943
          %v947 = vclz %v946
          %v948 = vsub.s32 %v947, 2
          %vm949 = vcmp.gt.s32.totalorder 0, %v948
          %v950 = vsel %vm949, 0, %v948
          %v951 = vsub.s32 32, %v950
          %v952 = vshll.u32 %v943, %v950
          %v953 = vshrl.u32 %v935, %v951
          %v954 = vor.u32 %v952, %v953
          %v955 = vsub.s32 4294967266, %v950
          %v956 = vadd.s32 %v955, 127
          %v957 = vshll.u32 %v956, 23
          %v958 = vor.u32 4788187, %v957
          %v959 = vand.u32 2147483647, %v958
          %v961 = vcvt.s32.f32 %v954
          %v962 = vmul.f32 %v961, %v959
          %v963 = vxor.u32 %v962, 2147483648
          %v964 = vsel %vm881, %v963, %v962
          %v965 = vsub.s32 4, %v941
          %v966 = vsel %vm881, %v965, %v941
          %v967 = vsel %vm880, %v148, %v964
          %v968 = vsel %vm880, 0, %v966
          %v969 = vcosq.f32.pop %v967
          %v970 = vsinq.f32.pop %v967
          %vm971 = vweird.f32 %v148
          %v972 = vand.u32 %v968, 3
          %vm973 = vcmp.lt.s32.totalorder %v972, 2
          %vm974 = vcmp.eq.s32.totalorder %v972, 0
          %v975 = vxor.u32 %v970, 2147483648
          %v976 = vsel %vm974, %v969, %v975
          %vm977 = vcmp.eq.s32.totalorder %v972, 2
          %v978 = vxor.u32 %v969, 2147483648
          %v979 = vsel %vm977, %v978, %v970
          %v980 = vsel %vm973, %v976, %v979
          %v981 = vsel %vm971, nan, %v980
          %s982 = sadd.s32 %s143, 384
          %s983 = scalar_lea.vmem %s134, %s982 [#allocation5]
          %984 = vst [vmem:[%s983] sm:$0xff] %v257
          %985 = vst [vmem:[%s983 + $0x8] sm:$0xff] %v361
          %986 = vst [vmem:[%s983 + $0x10] sm:$0xff] %v465
          %987 = vst [vmem:[%s983 + $0x18] sm:$0xff] %v569
          %s988 = sadd.s32 %s143, 768
          %s989 = scalar_lea.vmem %s134, %s988 [#allocation5]
          %990 = vst [vmem:[%s989] sm:$0xff] %v672
          %991 = vst [vmem:[%s989 + $0x8] sm:$0xff] %v775
          %992 = vst [vmem:[%s989 + $0x10] sm:$0xff] %v878
          %993 = vst [vmem:[%s989 + $0x18] sm:$0xff] %v981
          %v994 = vmul.f32 %v145, 56.77778
          %v995 = vmul.f32 %v146, 56.77778
          %v996 = vmul.f32 %v147, 56.77778
          %v997 = vmul.f32 %v148, 56.77778
          %v998 = vand.u32 2147483647, %v994
          %vm999 = vcmp.le.f32.partialorder %v998, 0.7853982
          %vm1000 = vcmp.lt.s32.totalorder %v994, 0
          %v1001 = vand.u32 %v994, 2139095040
          %v1002 = vshrl.u32 %v1001, 23
          %v1003 = vsub.s32 %v1002, 127
          %v1004 = vand.u32 2147483647, %v994
          %v1005 = vand.u32 %v1004, 8388607
          %v1006 = vor.u32 %v1005, 8388608
          %v1007 = vsub.s32 0, %v1006
          %v1008 = vadd.s32 %v1003, 1
          %vm1009 = vcmp.gt.s32.totalorder %v1008, 0
          %v1010 = vsel %vm1009, %v1008, 0
          %v1011 = vshrl.u32 %v1010, 5
          %v1012 = vand.u32 %v1010, 31
          %v1013 = vsub.s32 32, %v1012
          %v1014 = vshrl.u32 683565275, %v1013
          %v1015 = vshll.u32 683565275, %v1012
          %v1016 = vshrl.u32 2475754826, %v1013
          %v1017 = vor.u32 %v1015, %v1016
          %v1018 = vshll.u32 2475754826, %v1012
          %v1019 = vshrl.u32 2131351028, %v1013
          %v1020 = vor.u32 %v1018, %v1019
          %v1021 = vshll.u32 2131351028, %v1012
          %v1022 = vshrl.u32 2102212464, %v1013
          %v1023 = vor.u32 %v1021, %v1022
          %v1024 = vshll.u32 2102212464, %v1012
          %v1025 = vshrl.u32 920167782, %v1013
          %v1026 = vor.u32 %v1024, %v1025
          %v1027 = vshll.u32 920167782, %v1012
          %v1028 = vshrl.u32 1326507024, %v1013
          %v1029 = vor.u32 %v1027, %v1028
          %vm1030 = vcmp.lt.s32.totalorder %v1011, 1
          %vm1031 = vcmp.lt.s32.totalorder %v1011, 2
          %vm1032 = vcmp.lt.s32.totalorder %v1011, 3
          %vm1033 = vcmp.lt.s32.totalorder %v1011, 4
          %v1034 = vsel %vm1030, %v1014, %v1017
          %v1035 = vsel %vm1033, %v1023, 2102212464
          %v1036 = vsel %vm1032, %v1020, %v1035
          %v1037 = vsel %vm1031, %v1034, %v1036
          %v1038 = vsel %vm1030, %v1017, %v1020
          %v1039 = vsel %vm1033, %v1026, 920167782
          %v1040 = vsel %vm1032, %v1023, %v1039
          %v1041 = vsel %vm1031, %v1038, %v1040
          %v1042 = vsel %vm1030, %v1020, %v1023
          %v1043 = vsel %vm1033, %v1029, 1326507024
          %v1044 = vsel %vm1032, %v1026, %v1043
          %v1045 = vsel %vm1031, %v1042, %v1044
          %v1046 = vshll.u32 %v1006, 8
          %v1047 = vmul.u32.u64.compose %v1046, %v1045
          %v1048 = vextract.low.u32 %v1047
          %v1049 = vextract.high.u32 %v1047
          %v1050 = vmul.u32.u64.compose %v1046, %v1041
          %v1051 = vextract.low.u32 %v1050
          %v1052 = vextract.high.u32 %v1050
          %v1053 = vmul.u32 %v1046, %v1037
          %v1054 = vadd.s32 %v1049, %v1051
          %vm1055 = vc.u32 %v1049, %v1051
          %v1056 = vadd.s32 %v1052, 1
          %v1057 = vsel %vm1055, %v1056, %v1052
          %v1058 = vadd.s32 %v1053, %v1057
          %v1059 = vadd.s32 %v1058, 536870912
          %v1060 = vshrl.u32 %v1059, 30
          %v1061 = vshll.u32 %v1060, 30
          %v1062 = vsub.s32 %v1058, %v1061
          %vm1063 = vcmp.lt.s32.totalorder %v1062, 0
          %v1064 = vsub.s32 0, %v1062
          %v1065 = vsel %vm1063, %v1064, %v1062
          %v1066 = vclz %v1065
          %v1067 = vsub.s32 %v1066, 2
          %vm1068 = vcmp.gt.s32.totalorder 0, %v1067
          %v1069 = vsel %vm1068, 0, %v1067
          %v1070 = vsub.s32 32, %v1069
          %v1071 = vshll.u32 %v1062, %v1069
          %v1072 = vshrl.u32 %v1054, %v1070
          %v1073 = vor.u32 %v1071, %v1072
          %v1074 = vsub.s32 4294967266, %v1069
          %v1075 = vadd.s32 %v1074, 127
          %v1076 = vshll.u32 %v1075, 23
          %v1077 = vor.u32 4788187, %v1076
          %v1078 = vand.u32 2147483647, %v1077
          %v1080 = vcvt.s32.f32 %v1073
          %v1081 = vmul.f32 %v1080, %v1078
          %v1082 = vxor.u32 %v1081, 2147483648
          %v1083 = vsel %vm1000, %v1082, %v1081
          %v1084 = vsub.s32 4, %v1060
          %v1085 = vsel %vm1000, %v1084, %v1060
          %v1086 = vsel %vm999, %v994, %v1083
          %v1087 = vsel %vm999, 0, %v1085
          %v1088 = vcosq.f32.pop %v1086
          %v1089 = vsinq.f32.pop %v1086
          %vm1090 = vweird.f32 %v994
          %v1091 = vadd.s32 %v1087, 3
          %v1092 = vand.u32 %v1091, 3
          %vm1093 = vcmp.lt.s32.totalorder %v1092, 2
          %vm1094 = vcmp.eq.s32.totalorder %v1092, 0
          %v1095 = vxor.u32 %v1089, 2147483648
          %v1096 = vsel %vm1094, %v1088, %v1095
          %vm1097 = vcmp.eq.s32.totalorder %v1092, 2
          %v1098 = vxor.u32 %v1088, 2147483648
          %v1099 = vsel %vm1097, %v1098, %v1089
          %v1100 = vsel %vm1093, %v1096, %v1099
          %v1101 = vsel %vm1090, nan, %v1100
          %v1102 = vand.u32 2147483647, %v995
          %vm1103 = vcmp.le.f32.partialorder %v1102, 0.7853982
          %vm1104 = vcmp.lt.s32.totalorder %v995, 0
          %v1105 = vand.u32 %v995, 2139095040
          %v1106 = vshrl.u32 %v1105, 23
          %v1107 = vsub.s32 %v1106, 127
          %v1108 = vand.u32 2147483647, %v995
          %v1109 = vand.u32 %v1108, 8388607
          %v1110 = vor.u32 %v1109, 8388608
          %v1111 = vsub.s32 0, %v1110
          %v1112 = vadd.s32 %v1107, 1
          %vm1113 = vcmp.gt.s32.totalorder %v1112, 0
          %v1114 = vsel %vm1113, %v1112, 0
          %v1115 = vshrl.u32 %v1114, 5
          %v1116 = vand.u32 %v1114, 31
          %v1117 = vsub.s32 32, %v1116
          %v1118 = vshrl.u32 683565275, %v1117
          %v1119 = vshll.u32 683565275, %v1116
          %v1120 = vshrl.u32 2475754826, %v1117
          %v1121 = vor.u32 %v1119, %v1120
          %v1122 = vshll.u32 2475754826, %v1116
          %v1123 = vshrl.u32 2131351028, %v1117
          %v1124 = vor.u32 %v1122, %v1123
          %v1125 = vshll.u32 2131351028, %v1116
          %v1126 = vshrl.u32 2102212464, %v1117
          %v1127 = vor.u32 %v1125, %v1126
          %v1128 = vshll.u32 2102212464, %v1116
          %v1129 = vshrl.u32 920167782, %v1117
          %v1130 = vor.u32 %v1128, %v1129
          %v1131 = vshll.u32 920167782, %v1116
          %v1132 = vshrl.u32 1326507024, %v1117
          %v1133 = vor.u32 %v1131, %v1132
          %vm1134 = vcmp.lt.s32.totalorder %v1115, 1
          %vm1135 = vcmp.lt.s32.totalorder %v1115, 2
          %vm1136 = vcmp.lt.s32.totalorder %v1115, 3
          %vm1137 = vcmp.lt.s32.totalorder %v1115, 4
          %v1138 = vsel %vm1134, %v1118, %v1121
          %v1139 = vsel %vm1137, %v1127, 2102212464
          %v1140 = vsel %vm1136, %v1124, %v1139
          %v1141 = vsel %vm1135, %v1138, %v1140
          %v1142 = vsel %vm1134, %v1121, %v1124
          %v1143 = vsel %vm1137, %v1130, 920167782
          %v1144 = vsel %vm1136, %v1127, %v1143
          %v1145 = vsel %vm1135, %v1142, %v1144
          %v1146 = vsel %vm1134, %v1124, %v1127
          %v1147 = vsel %vm1137, %v1133, 1326507024
          %v1148 = vsel %vm1136, %v1130, %v1147
          %v1149 = vsel %vm1135, %v1146, %v1148
          %v1150 = vshll.u32 %v1110, 8
          %v1151 = vmul.u32.u64.compose %v1150, %v1149
          %v1152 = vextract.low.u32 %v1151
          %v1153 = vextract.high.u32 %v1151
          %v1154 = vmul.u32.u64.compose %v1150, %v1145
          %v1155 = vextract.low.u32 %v1154
          %v1156 = vextract.high.u32 %v1154
          %v1157 = vmul.u32 %v1150, %v1141
          %v1158 = vadd.s32 %v1153, %v1155
          %vm1159 = vc.u32 %v1153, %v1155
          %v1160 = vadd.s32 %v1156, 1
          %v1161 = vsel %vm1159, %v1160, %v1156
          %v1162 = vadd.s32 %v1157, %v1161
          %v1163 = vadd.s32 %v1162, 536870912
          %v1164 = vshrl.u32 %v1163, 30
          %v1165 = vshll.u32 %v1164, 30
          %v1166 = vsub.s32 %v1162, %v1165
          %vm1167 = vcmp.lt.s32.totalorder %v1166, 0
          %v1168 = vsub.s32 0, %v1166
          %v1169 = vsel %vm1167, %v1168, %v1166
          %v1170 = vclz %v1169
          %v1171 = vsub.s32 %v1170, 2
          %vm1172 = vcmp.gt.s32.totalorder 0, %v1171
          %v1173 = vsel %vm1172, 0, %v1171
          %v1174 = vsub.s32 32, %v1173
          %v1175 = vshll.u32 %v1166, %v1173
          %v1176 = vshrl.u32 %v1158, %v1174
          %v1177 = vor.u32 %v1175, %v1176
          %v1178 = vsub.s32 4294967266, %v1173
          %v1179 = vadd.s32 %v1178, 127
          %v1180 = vshll.u32 %v1179, 23
          %v1181 = vor.u32 4788187, %v1180
          %v1182 = vand.u32 2147483647, %v1181
          %v1184 = vcvt.s32.f32 %v1177
          %v1185 = vmul.f32 %v1184, %v1182
          %v1186 = vxor.u32 %v1185, 2147483648
          %v1187 = vsel %vm1104, %v1186, %v1185
          %v1188 = vsub.s32 4, %v1164
          %v1189 = vsel %vm1104, %v1188, %v1164
          %v1190 = vsel %vm1103, %v995, %v1187
          %v1191 = vsel %vm1103, 0, %v1189
          %v1192 = vcosq.f32.pop %v1190
          %v1193 = vsinq.f32.pop %v1190
          %vm1194 = vweird.f32 %v995
          %v1195 = vadd.s32 %v1191, 3
          %v1196 = vand.u32 %v1195, 3
          %vm1197 = vcmp.lt.s32.totalorder %v1196, 2
          %vm1198 = vcmp.eq.s32.totalorder %v1196, 0
          %v1199 = vxor.u32 %v1193, 2147483648
          %v1200 = vsel %vm1198, %v1192, %v1199
          %vm1201 = vcmp.eq.s32.totalorder %v1196, 2
          %v1202 = vxor.u32 %v1192, 2147483648
          %v1203 = vsel %vm1201, %v1202, %v1193
          %v1204 = vsel %vm1197, %v1200, %v1203
          %v1205 = vsel %vm1194, nan, %v1204
          %v1206 = vand.u32 2147483647, %v996
          %vm1207 = vcmp.le.f32.partialorder %v1206, 0.7853982
          %vm1208 = vcmp.lt.s32.totalorder %v996, 0
          %v1209 = vand.u32 %v996, 2139095040
          %v1210 = vshrl.u32 %v1209, 23
          %v1211 = vsub.s32 %v1210, 127
          %v1212 = vand.u32 2147483647, %v996
          %v1213 = vand.u32 %v1212, 8388607
          %v1214 = vor.u32 %v1213, 8388608
          %v1215 = vsub.s32 0, %v1214
          %v1216 = vadd.s32 %v1211, 1
          %vm1217 = vcmp.gt.s32.totalorder %v1216, 0
          %v1218 = vsel %vm1217, %v1216, 0
          %v1219 = vshrl.u32 %v1218, 5
          %v1220 = vand.u32 %v1218, 31
          %v1221 = vsub.s32 32, %v1220
          %v1222 = vshrl.u32 683565275, %v1221
          %v1223 = vshll.u32 683565275, %v1220
          %v1224 = vshrl.u32 2475754826, %v1221
          %v1225 = vor.u32 %v1223, %v1224
          %v1226 = vshll.u32 2475754826, %v1220
          %v1227 = vshrl.u32 2131351028, %v1221
          %v1228 = vor.u32 %v1226, %v1227
          %v1229 = vshll.u32 2131351028, %v1220
          %v1230 = vshrl.u32 2102212464, %v1221
          %v1231 = vor.u32 %v1229, %v1230
          %v1232 = vshll.u32 2102212464, %v1220
          %v1233 = vshrl.u32 920167782, %v1221
          %v1234 = vor.u32 %v1232, %v1233
          %v1235 = vshll.u32 920167782, %v1220
          %v1236 = vshrl.u32 1326507024, %v1221
          %v1237 = vor.u32 %v1235, %v1236
          %vm1238 = vcmp.lt.s32.totalorder %v1219, 1
          %vm1239 = vcmp.lt.s32.totalorder %v1219, 2
          %vm1240 = vcmp.lt.s32.totalorder %v1219, 3
          %vm1241 = vcmp.lt.s32.totalorder %v1219, 4
          %v1242 = vsel %vm1238, %v1222, %v1225
          %v1243 = vsel %vm1241, %v1231, 2102212464
          %v1244 = vsel %vm1240, %v1228, %v1243
          %v1245 = vsel %vm1239, %v1242, %v1244
          %v1246 = vsel %vm1238, %v1225, %v1228
          %v1247 = vsel %vm1241, %v1234, 920167782
          %v1248 = vsel %vm1240, %v1231, %v1247
          %v1249 = vsel %vm1239, %v1246, %v1248
          %v1250 = vsel %vm1238, %v1228, %v1231
          %v1251 = vsel %vm1241, %v1237, 1326507024
          %v1252 = vsel %vm1240, %v1234, %v1251
          %v1253 = vsel %vm1239, %v1250, %v1252
          %v1254 = vshll.u32 %v1214, 8
          %v1255 = vmul.u32.u64.compose %v1254, %v1253
          %v1256 = vextract.low.u32 %v1255
          %v1257 = vextract.high.u32 %v1255
          %v1258 = vmul.u32.u64.compose %v1254, %v1249
          %v1259 = vextract.low.u32 %v1258
          %v1260 = vextract.high.u32 %v1258
          %v1261 = vmul.u32 %v1254, %v1245
          %v1262 = vadd.s32 %v1257, %v1259
          %vm1263 = vc.u32 %v1257, %v1259
          %v1264 = vadd.s32 %v1260, 1
          %v1265 = vsel %vm1263, %v1264, %v1260
          %v1266 = vadd.s32 %v1261, %v1265
          %v1267 = vadd.s32 %v1266, 536870912
          %v1268 = vshrl.u32 %v1267, 30
          %v1269 = vshll.u32 %v1268, 30
          %v1270 = vsub.s32 %v1266, %v1269
          %vm1271 = vcmp.lt.s32.totalorder %v1270, 0
          %v1272 = vsub.s32 0, %v1270
          %v1273 = vsel %vm1271, %v1272, %v1270
          %v1274 = vclz %v1273
          %v1275 = vsub.s32 %v1274, 2
          %vm1276 = vcmp.gt.s32.totalorder 0, %v1275
          %v1277 = vsel %vm1276, 0, %v1275
          %v1278 = vsub.s32 32, %v1277
          %v1279 = vshll.u32 %v1270, %v1277
          %v1280 = vshrl.u32 %v1262, %v1278
          %v1281 = vor.u32 %v1279, %v1280
          %v1282 = vsub.s32 4294967266, %v1277
          %v1283 = vadd.s32 %v1282, 127
          %v1284 = vshll.u32 %v1283, 23
          %v1285 = vor.u32 4788187, %v1284
          %v1286 = vand.u32 2147483647, %v1285
          %v1288 = vcvt.s32.f32 %v1281
          %v1289 = vmul.f32 %v1288, %v1286
          %v1290 = vxor.u32 %v1289, 2147483648
          %v1291 = vsel %vm1208, %v1290, %v1289
          %v1292 = vsub.s32 4, %v1268
          %v1293 = vsel %vm1208, %v1292, %v1268
          %v1294 = vsel %vm1207, %v996, %v1291
          %v1295 = vsel %vm1207, 0, %v1293
          %v1296 = vcosq.f32.pop %v1294
          %v1297 = vsinq.f32.pop %v1294
          %vm1298 = vweird.f32 %v996
          %v1299 = vadd.s32 %v1295, 3
          %v1300 = vand.u32 %v1299, 3
          %vm1301 = vcmp.lt.s32.totalorder %v1300, 2
          %vm1302 = vcmp.eq.s32.totalorder %v1300, 0
          %v1303 = vxor.u32 %v1297, 2147483648
          %v1304 = vsel %vm1302, %v1296, %v1303
          %vm1305 = vcmp.eq.s32.totalorder %v1300, 2
          %v1306 = vxor.u32 %v1296, 2147483648
          %v1307 = vsel %vm1305, %v1306, %v1297
          %v1308 = vsel %vm1301, %v1304, %v1307
          %v1309 = vsel %vm1298, nan, %v1308
          %v1310 = vand.u32 2147483647, %v997
          %vm1311 = vcmp.le.f32.partialorder %v1310, 0.7853982
          %vm1312 = vcmp.lt.s32.totalorder %v997, 0
          %v1313 = vand.u32 %v997, 2139095040
          %v1314 = vshrl.u32 %v1313, 23
          %v1315 = vsub.s32 %v1314, 127
          %v1316 = vand.u32 2147483647, %v997
          %v1317 = vand.u32 %v1316, 8388607
          %v1318 = vor.u32 %v1317, 8388608
          %v1319 = vsub.s32 0, %v1318
          %v1320 = vadd.s32 %v1315, 1
          %vm1321 = vcmp.gt.s32.totalorder %v1320, 0
          %v1322 = vsel %vm1321, %v1320, 0
          %v1323 = vshrl.u32 %v1322, 5
          %v1324 = vand.u32 %v1322, 31
          %v1325 = vsub.s32 32, %v1324
          %v1326 = vshrl.u32 683565275, %v1325
          %v1327 = vshll.u32 683565275, %v1324
          %v1328 = vshrl.u32 2475754826, %v1325
          %v1329 = vor.u32 %v1327, %v1328
          %v1330 = vshll.u32 2475754826, %v1324
          %v1331 = vshrl.u32 2131351028, %v1325
          %v1332 = vor.u32 %v1330, %v1331
          %v1333 = vshll.u32 2131351028, %v1324
          %v1334 = vshrl.u32 2102212464, %v1325
          %v1335 = vor.u32 %v1333, %v1334
          %v1336 = vshll.u32 2102212464, %v1324
          %v1337 = vshrl.u32 920167782, %v1325
          %v1338 = vor.u32 %v1336, %v1337
          %v1339 = vshll.u32 920167782, %v1324
          %v1340 = vshrl.u32 1326507024, %v1325
          %v1341 = vor.u32 %v1339, %v1340
          %vm1342 = vcmp.lt.s32.totalorder %v1323, 1
          %vm1343 = vcmp.lt.s32.totalorder %v1323, 2
          %vm1344 = vcmp.lt.s32.totalorder %v1323, 3
          %vm1345 = vcmp.lt.s32.totalorder %v1323, 4
          %v1346 = vsel %vm1342, %v1326, %v1329
          %v1347 = vsel %vm1345, %v1335, 2102212464
          %v1348 = vsel %vm1344, %v1332, %v1347
          %v1349 = vsel %vm1343, %v1346, %v1348
          %v1350 = vsel %vm1342, %v1329, %v1332
          %v1351 = vsel %vm1345, %v1338, 920167782
          %v1352 = vsel %vm1344, %v1335, %v1351
          %v1353 = vsel %vm1343, %v1350, %v1352
          %v1354 = vsel %vm1342, %v1332, %v1335
          %v1355 = vsel %vm1345, %v1341, 1326507024
          %v1356 = vsel %vm1344, %v1338, %v1355
          %v1357 = vsel %vm1343, %v1354, %v1356
          %v1358 = vshll.u32 %v1318, 8
          %v1359 = vmul.u32.u64.compose %v1358, %v1357
          %v1360 = vextract.low.u32 %v1359
          %v1361 = vextract.high.u32 %v1359
          %v1362 = vmul.u32.u64.compose %v1358, %v1353
          %v1363 = vextract.low.u32 %v1362
          %v1364 = vextract.high.u32 %v1362
          %v1365 = vmul.u32 %v1358, %v1349
          %v1366 = vadd.s32 %v1361, %v1363
          %vm1367 = vc.u32 %v1361, %v1363
          %v1368 = vadd.s32 %v1364, 1
          %v1369 = vsel %vm1367, %v1368, %v1364
          %v1370 = vadd.s32 %v1365, %v1369
          %v1371 = vadd.s32 %v1370, 536870912
          %v1372 = vshrl.u32 %v1371, 30
          %v1373 = vshll.u32 %v1372, 30
          %v1374 = vsub.s32 %v1370, %v1373
          %vm1375 = vcmp.lt.s32.totalorder %v1374, 0
          %v1376 = vsub.s32 0, %v1374
          %v1377 = vsel %vm1375, %v1376, %v1374
          %v1378 = vclz %v1377
          %v1379 = vsub.s32 %v1378, 2
          %vm1380 = vcmp.gt.s32.totalorder 0, %v1379
          %v1381 = vsel %vm1380, 0, %v1379
          %v1382 = vsub.s32 32, %v1381
          %v1383 = vshll.u32 %v1374, %v1381
          %v1384 = vshrl.u32 %v1366, %v1382
          %v1385 = vor.u32 %v1383, %v1384
          %v1386 = vsub.s32 4294967266, %v1381
          %v1387 = vadd.s32 %v1386, 127
          %v1388 = vshll.u32 %v1387, 23
          %v1389 = vor.u32 4788187, %v1388
          %v1390 = vand.u32 2147483647, %v1389
          %v1392 = vcvt.s32.f32 %v1385
          %v1393 = vmul.f32 %v1392, %v1390
          %v1394 = vxor.u32 %v1393, 2147483648
          %v1395 = vsel %vm1312, %v1394, %v1393
          %v1396 = vsub.s32 4, %v1372
          %v1397 = vsel %vm1312, %v1396, %v1372
          %v1398 = vsel %vm1311, %v997, %v1395
          %v1399 = vsel %vm1311, 0, %v1397
          %v1400 = vcosq.f32.pop %v1398
          %v1401 = vsinq.f32.pop %v1398
          %vm1402 = vweird.f32 %v997
          %v1403 = vadd.s32 %v1399, 3
          %v1404 = vand.u32 %v1403, 3
          %vm1405 = vcmp.lt.s32.totalorder %v1404, 2
          %vm1406 = vcmp.eq.s32.totalorder %v1404, 0
          %v1407 = vxor.u32 %v1401, 2147483648
          %v1408 = vsel %vm1406, %v1400, %v1407
          %vm1409 = vcmp.eq.s32.totalorder %v1404, 2
          %v1410 = vxor.u32 %v1400, 2147483648
          %v1411 = vsel %vm1409, %v1410, %v1401
          %v1412 = vsel %vm1405, %v1408, %v1411
          %v1413 = vsel %vm1402, nan, %v1412
          %v1414 = vand.u32 2147483647, %v994
          %vm1415 = vcmp.le.f32.partialorder %v1414, 0.7853982
          %vm1416 = vcmp.lt.s32.totalorder %v994, 0
          %v1417 = vand.u32 %v994, 2139095040
          %v1418 = vshrl.u32 %v1417, 23
          %v1419 = vsub.s32 %v1418, 127
          %v1420 = vand.u32 2147483647, %v994
          %v1421 = vand.u32 %v1420, 8388607
          %v1422 = vor.u32 %v1421, 8388608
          %v1423 = vsub.s32 0, %v1422
          %v1424 = vadd.s32 %v1419, 1
          %vm1425 = vcmp.gt.s32.totalorder %v1424, 0
          %v1426 = vsel %vm1425, %v1424, 0
          %v1427 = vshrl.u32 %v1426, 5
          %v1428 = vand.u32 %v1426, 31
          %v1429 = vsub.s32 32, %v1428
          %v1430 = vshrl.u32 683565275, %v1429
          %v1431 = vshll.u32 683565275, %v1428
          %v1432 = vshrl.u32 2475754826, %v1429
          %v1433 = vor.u32 %v1431, %v1432
          %v1434 = vshll.u32 2475754826, %v1428
          %v1435 = vshrl.u32 2131351028, %v1429
          %v1436 = vor.u32 %v1434, %v1435
          %v1437 = vshll.u32 2131351028, %v1428
          %v1438 = vshrl.u32 2102212464, %v1429
          %v1439 = vor.u32 %v1437, %v1438
          %v1440 = vshll.u32 2102212464, %v1428
          %v1441 = vshrl.u32 920167782, %v1429
          %v1442 = vor.u32 %v1440, %v1441
          %v1443 = vshll.u32 920167782, %v1428
          %v1444 = vshrl.u32 1326507024, %v1429
          %v1445 = vor.u32 %v1443, %v1444
          %vm1446 = vcmp.lt.s32.totalorder %v1427, 1
          %vm1447 = vcmp.lt.s32.totalorder %v1427, 2
          %vm1448 = vcmp.lt.s32.totalorder %v1427, 3
          %vm1449 = vcmp.lt.s32.totalorder %v1427, 4
          %v1450 = vsel %vm1446, %v1430, %v1433
          %v1451 = vsel %vm1449, %v1439, 2102212464
          %v1452 = vsel %vm1448, %v1436, %v1451
          %v1453 = vsel %vm1447, %v1450, %v1452
          %v1454 = vsel %vm1446, %v1433, %v1436
          %v1455 = vsel %vm1449, %v1442, 920167782
          %v1456 = vsel %vm1448, %v1439, %v1455
          %v1457 = vsel %vm1447, %v1454, %v1456
          %v1458 = vsel %vm1446, %v1436, %v1439
          %v1459 = vsel %vm1449, %v1445, 1326507024
          %v1460 = vsel %vm1448, %v1442, %v1459
          %v1461 = vsel %vm1447, %v1458, %v1460
          %v1462 = vshll.u32 %v1422, 8
          %v1463 = vmul.u32.u64.compose %v1462, %v1461
          %v1464 = vextract.low.u32 %v1463
          %v1465 = vextract.high.u32 %v1463
          %v1466 = vmul.u32.u64.compose %v1462, %v1457
          %v1467 = vextract.low.u32 %v1466
          %v1468 = vextract.high.u32 %v1466
          %v1469 = vmul.u32 %v1462, %v1453
          %v1470 = vadd.s32 %v1465, %v1467
          %vm1471 = vc.u32 %v1465, %v1467
          %v1472 = vadd.s32 %v1468, 1
          %v1473 = vsel %vm1471, %v1472, %v1468
          %v1474 = vadd.s32 %v1469, %v1473
          %v1475 = vadd.s32 %v1474, 536870912
          %v1476 = vshrl.u32 %v1475, 30
          %v1477 = vshll.u32 %v1476, 30
          %v1478 = vsub.s32 %v1474, %v1477
          %vm1479 = vcmp.lt.s32.totalorder %v1478, 0
          %v1480 = vsub.s32 0, %v1478
          %v1481 = vsel %vm1479, %v1480, %v1478
          %v1482 = vclz %v1481
          %v1483 = vsub.s32 %v1482, 2
          %vm1484 = vcmp.gt.s32.totalorder 0, %v1483
          %v1485 = vsel %vm1484, 0, %v1483
          %v1486 = vsub.s32 32, %v1485
          %v1487 = vshll.u32 %v1478, %v1485
          %v1488 = vshrl.u32 %v1470, %v1486
          %v1489 = vor.u32 %v1487, %v1488
          %v1490 = vsub.s32 4294967266, %v1485
          %v1491 = vadd.s32 %v1490, 127
          %v1492 = vshll.u32 %v1491, 23
          %v1493 = vor.u32 4788187, %v1492
          %v1494 = vand.u32 2147483647, %v1493
          %v1496 = vcvt.s32.f32 %v1489
          %v1497 = vmul.f32 %v1496, %v1494
          %v1498 = vxor.u32 %v1497, 2147483648
          %v1499 = vsel %vm1416, %v1498, %v1497
          %v1500 = vsub.s32 4, %v1476
          %v1501 = vsel %vm1416, %v1500, %v1476
          %v1502 = vsel %vm1415, %v994, %v1499
          %v1503 = vsel %vm1415, 0, %v1501
          %v1504 = vcosq.f32.pop %v1502
          %v1505 = vsinq.f32.pop %v1502
          %vm1506 = vweird.f32 %v994
          %v1507 = vand.u32 %v1503, 3
          %vm1508 = vcmp.lt.s32.totalorder %v1507, 2
          %vm1509 = vcmp.eq.s32.totalorder %v1507, 0
          %v1510 = vxor.u32 %v1505, 2147483648
          %v1511 = vsel %vm1509, %v1504, %v1510
          %vm1512 = vcmp.eq.s32.totalorder %v1507, 2
          %v1513 = vxor.u32 %v1504, 2147483648
          %v1514 = vsel %vm1512, %v1513, %v1505
          %v1515 = vsel %vm1508, %v1511, %v1514
          %v1516 = vsel %vm1506, nan, %v1515
          %v1517 = vand.u32 2147483647, %v995
          %vm1518 = vcmp.le.f32.partialorder %v1517, 0.7853982
          %vm1519 = vcmp.lt.s32.totalorder %v995, 0
          %v1520 = vand.u32 %v995, 2139095040
          %v1521 = vshrl.u32 %v1520, 23
          %v1522 = vsub.s32 %v1521, 127
          %v1523 = vand.u32 2147483647, %v995
          %v1524 = vand.u32 %v1523, 8388607
          %v1525 = vor.u32 %v1524, 8388608
          %v1526 = vsub.s32 0, %v1525
          %v1527 = vadd.s32 %v1522, 1
          %vm1528 = vcmp.gt.s32.totalorder %v1527, 0
          %v1529 = vsel %vm1528, %v1527, 0
          %v1530 = vshrl.u32 %v1529, 5
          %v1531 = vand.u32 %v1529, 31
          %v1532 = vsub.s32 32, %v1531
          %v1533 = vshrl.u32 683565275, %v1532
          %v1534 = vshll.u32 683565275, %v1531
          %v1535 = vshrl.u32 2475754826, %v1532
          %v1536 = vor.u32 %v1534, %v1535
          %v1537 = vshll.u32 2475754826, %v1531
          %v1538 = vshrl.u32 2131351028, %v1532
          %v1539 = vor.u32 %v1537, %v1538
          %v1540 = vshll.u32 2131351028, %v1531
          %v1541 = vshrl.u32 2102212464, %v1532
          %v1542 = vor.u32 %v1540, %v1541
          %v1543 = vshll.u32 2102212464, %v1531
          %v1544 = vshrl.u32 920167782, %v1532
          %v1545 = vor.u32 %v1543, %v1544
          %v1546 = vshll.u32 920167782, %v1531
          %v1547 = vshrl.u32 1326507024, %v1532
          %v1548 = vor.u32 %v1546, %v1547
          %vm1549 = vcmp.lt.s32.totalorder %v1530, 1
          %vm1550 = vcmp.lt.s32.totalorder %v1530, 2
          %vm1551 = vcmp.lt.s32.totalorder %v1530, 3
          %vm1552 = vcmp.lt.s32.totalorder %v1530, 4
          %v1553 = vsel %vm1549, %v1533, %v1536
          %v1554 = vsel %vm1552, %v1542, 2102212464
          %v1555 = vsel %vm1551, %v1539, %v1554
          %v1556 = vsel %vm1550, %v1553, %v1555
          %v1557 = vsel %vm1549, %v1536, %v1539
          %v1558 = vsel %vm1552, %v1545, 920167782
          %v1559 = vsel %vm1551, %v1542, %v1558
          %v1560 = vsel %vm1550, %v1557, %v1559
          %v1561 = vsel %vm1549, %v1539, %v1542
          %v1562 = vsel %vm1552, %v1548, 1326507024
          %v1563 = vsel %vm1551, %v1545, %v1562
          %v1564 = vsel %vm1550, %v1561, %v1563
          %v1565 = vshll.u32 %v1525, 8
          %v1566 = vmul.u32.u64.compose %v1565, %v1564
          %v1567 = vextract.low.u32 %v1566
          %v1568 = vextract.high.u32 %v1566
          %v1569 = vmul.u32.u64.compose %v1565, %v1560
          %v1570 = vextract.low.u32 %v1569
          %v1571 = vextract.high.u32 %v1569
          %v1572 = vmul.u32 %v1565, %v1556
          %v1573 = vadd.s32 %v1568, %v1570
          %vm1574 = vc.u32 %v1568, %v1570
          %v1575 = vadd.s32 %v1571, 1
          %v1576 = vsel %vm1574, %v1575, %v1571
          %v1577 = vadd.s32 %v1572, %v1576
          %v1578 = vadd.s32 %v1577, 536870912
          %v1579 = vshrl.u32 %v1578, 30
          %v1580 = vshll.u32 %v1579, 30
          %v1581 = vsub.s32 %v1577, %v1580
          %vm1582 = vcmp.lt.s32.totalorder %v1581, 0
          %v1583 = vsub.s32 0, %v1581
          %v1584 = vsel %vm1582, %v1583, %v1581
          %v1585 = vclz %v1584
          %v1586 = vsub.s32 %v1585, 2
          %vm1587 = vcmp.gt.s32.totalorder 0, %v1586
          %v1588 = vsel %vm1587, 0, %v1586
          %v1589 = vsub.s32 32, %v1588
          %v1590 = vshll.u32 %v1581, %v1588
          %v1591 = vshrl.u32 %v1573, %v1589
          %v1592 = vor.u32 %v1590, %v1591
          %v1593 = vsub.s32 4294967266, %v1588
          %v1594 = vadd.s32 %v1593, 127
          %v1595 = vshll.u32 %v1594, 23
          %v1596 = vor.u32 4788187, %v1595
          %v1597 = vand.u32 2147483647, %v1596
          %v1599 = vcvt.s32.f32 %v1592
          %v1600 = vmul.f32 %v1599, %v1597
          %v1601 = vxor.u32 %v1600, 2147483648
          %v1602 = vsel %vm1519, %v1601, %v1600
          %v1603 = vsub.s32 4, %v1579
          %v1604 = vsel %vm1519, %v1603, %v1579
          %v1605 = vsel %vm1518, %v995, %v1602
          %v1606 = vsel %vm1518, 0, %v1604
          %v1607 = vcosq.f32.pop %v1605
          %v1608 = vsinq.f32.pop %v1605
          %vm1609 = vweird.f32 %v995
          %v1610 = vand.u32 %v1606, 3
          %vm1611 = vcmp.lt.s32.totalorder %v1610, 2
          %vm1612 = vcmp.eq.s32.totalorder %v1610, 0
          %v1613 = vxor.u32 %v1608, 2147483648
          %v1614 = vsel %vm1612, %v1607, %v1613
          %vm1615 = vcmp.eq.s32.totalorder %v1610, 2
          %v1616 = vxor.u32 %v1607, 2147483648
          %v1617 = vsel %vm1615, %v1616, %v1608
          %v1618 = vsel %vm1611, %v1614, %v1617
          %v1619 = vsel %vm1609, nan, %v1618
          %v1620 = vand.u32 2147483647, %v996
          %vm1621 = vcmp.le.f32.partialorder %v1620, 0.7853982
          %vm1622 = vcmp.lt.s32.totalorder %v996, 0
          %v1623 = vand.u32 %v996, 2139095040
          %v1624 = vshrl.u32 %v1623, 23
          %v1625 = vsub.s32 %v1624, 127
          %v1626 = vand.u32 2147483647, %v996
          %v1627 = vand.u32 %v1626, 8388607
          %v1628 = vor.u32 %v1627, 8388608
          %v1629 = vsub.s32 0, %v1628
          %v1630 = vadd.s32 %v1625, 1
          %vm1631 = vcmp.gt.s32.totalorder %v1630, 0
          %v1632 = vsel %vm1631, %v1630, 0
          %v1633 = vshrl.u32 %v1632, 5
          %v1634 = vand.u32 %v1632, 31
          %v1635 = vsub.s32 32, %v1634
          %v1636 = vshrl.u32 683565275, %v1635
          %v1637 = vshll.u32 683565275, %v1634
          %v1638 = vshrl.u32 2475754826, %v1635
          %v1639 = vor.u32 %v1637, %v1638
          %v1640 = vshll.u32 2475754826, %v1634
          %v1641 = vshrl.u32 2131351028, %v1635
          %v1642 = vor.u32 %v1640, %v1641
          %v1643 = vshll.u32 2131351028, %v1634
          %v1644 = vshrl.u32 2102212464, %v1635
          %v1645 = vor.u32 %v1643, %v1644
          %v1646 = vshll.u32 2102212464, %v1634
          %v1647 = vshrl.u32 920167782, %v1635
          %v1648 = vor.u32 %v1646, %v1647
          %v1649 = vshll.u32 920167782, %v1634
          %v1650 = vshrl.u32 1326507024, %v1635
          %v1651 = vor.u32 %v1649, %v1650
          %vm1652 = vcmp.lt.s32.totalorder %v1633, 1
          %vm1653 = vcmp.lt.s32.totalorder %v1633, 2
          %vm1654 = vcmp.lt.s32.totalorder %v1633, 3
          %vm1655 = vcmp.lt.s32.totalorder %v1633, 4
          %v1656 = vsel %vm1652, %v1636, %v1639
          %v1657 = vsel %vm1655, %v1645, 2102212464
          %v1658 = vsel %vm1654, %v1642, %v1657
          %v1659 = vsel %vm1653, %v1656, %v1658
          %v1660 = vsel %vm1652, %v1639, %v1642
          %v1661 = vsel %vm1655, %v1648, 920167782
          %v1662 = vsel %vm1654, %v1645, %v1661
          %v1663 = vsel %vm1653, %v1660, %v1662
          %v1664 = vsel %vm1652, %v1642, %v1645
          %v1665 = vsel %vm1655, %v1651, 1326507024
          %v1666 = vsel %vm1654, %v1648, %v1665
          %v1667 = vsel %vm1653, %v1664, %v1666
          %v1668 = vshll.u32 %v1628, 8
          %v1669 = vmul.u32.u64.compose %v1668, %v1667
          %v1670 = vextract.low.u32 %v1669
          %v1671 = vextract.high.u32 %v1669
          %v1672 = vmul.u32.u64.compose %v1668, %v1663
          %v1673 = vextract.low.u32 %v1672
          %v1674 = vextract.high.u32 %v1672
          %v1675 = vmul.u32 %v1668, %v1659
          %v1676 = vadd.s32 %v1671, %v1673
          %vm1677 = vc.u32 %v1671, %v1673
          %v1678 = vadd.s32 %v1674, 1
          %v1679 = vsel %vm1677, %v1678, %v1674
          %v1680 = vadd.s32 %v1675, %v1679
          %v1681 = vadd.s32 %v1680, 536870912
          %v1682 = vshrl.u32 %v1681, 30
          %v1683 = vshll.u32 %v1682, 30
          %v1684 = vsub.s32 %v1680, %v1683
          %vm1685 = vcmp.lt.s32.totalorder %v1684, 0
          %v1686 = vsub.s32 0, %v1684
          %v1687 = vsel %vm1685, %v1686, %v1684
          %v1688 = vclz %v1687
          %v1689 = vsub.s32 %v1688, 2
          %vm1690 = vcmp.gt.s32.totalorder 0, %v1689
          %v1691 = vsel %vm1690, 0, %v1689
          %v1692 = vsub.s32 32, %v1691
          %v1693 = vshll.u32 %v1684, %v1691
          %v1694 = vshrl.u32 %v1676, %v1692
          %v1695 = vor.u32 %v1693, %v1694
          %v1696 = vsub.s32 4294967266, %v1691
          %v1697 = vadd.s32 %v1696, 127
          %v1698 = vshll.u32 %v1697, 23
          %v1699 = vor.u32 4788187, %v1698
          %v1700 = vand.u32 2147483647, %v1699
          %v1702 = vcvt.s32.f32 %v1695
          %v1703 = vmul.f32 %v1702, %v1700
          %v1704 = vxor.u32 %v1703, 2147483648
          %v1705 = vsel %vm1622, %v1704, %v1703
          %v1706 = vsub.s32 4, %v1682
          %v1707 = vsel %vm1622, %v1706, %v1682
          %v1708 = vsel %vm1621, %v996, %v1705
          %v1709 = vsel %vm1621, 0, %v1707
          %v1710 = vcosq.f32.pop %v1708
          %v1711 = vsinq.f32.pop %v1708
          %vm1712 = vweird.f32 %v996
          %v1713 = vand.u32 %v1709, 3
          %vm1714 = vcmp.lt.s32.totalorder %v1713, 2
          %vm1715 = vcmp.eq.s32.totalorder %v1713, 0
          %v1716 = vxor.u32 %v1711, 2147483648
          %v1717 = vsel %vm1715, %v1710, %v1716
          %vm1718 = vcmp.eq.s32.totalorder %v1713, 2
          %v1719 = vxor.u32 %v1710, 2147483648
          %v1720 = vsel %vm1718, %v1719, %v1711
          %v1721 = vsel %vm1714, %v1717, %v1720
          %v1722 = vsel %vm1712, nan, %v1721
          %v1723 = vand.u32 2147483647, %v997
          %vm1724 = vcmp.le.f32.partialorder %v1723, 0.7853982
          %vm1725 = vcmp.lt.s32.totalorder %v997, 0
          %v1726 = vand.u32 %v997, 2139095040
          %v1727 = vshrl.u32 %v1726, 23
          %v1728 = vsub.s32 %v1727, 127
          %v1729 = vand.u32 2147483647, %v997
          %v1730 = vand.u32 %v1729, 8388607
          %v1731 = vor.u32 %v1730, 8388608
          %v1732 = vsub.s32 0, %v1731
          %v1733 = vadd.s32 %v1728, 1
          %vm1734 = vcmp.gt.s32.totalorder %v1733, 0
          %v1735 = vsel %vm1734, %v1733, 0
          %v1736 = vshrl.u32 %v1735, 5
          %v1737 = vand.u32 %v1735, 31
          %v1738 = vsub.s32 32, %v1737
          %v1739 = vshrl.u32 683565275, %v1738
          %v1740 = vshll.u32 683565275, %v1737
          %v1741 = vshrl.u32 2475754826, %v1738
          %v1742 = vor.u32 %v1740, %v1741
          %v1743 = vshll.u32 2475754826, %v1737
          %v1744 = vshrl.u32 2131351028, %v1738
          %v1745 = vor.u32 %v1743, %v1744
          %v1746 = vshll.u32 2131351028, %v1737
          %v1747 = vshrl.u32 2102212464, %v1738
          %v1748 = vor.u32 %v1746, %v1747
          %v1749 = vshll.u32 2102212464, %v1737
          %v1750 = vshrl.u32 920167782, %v1738
          %v1751 = vor.u32 %v1749, %v1750
          %v1752 = vshll.u32 920167782, %v1737
          %v1753 = vshrl.u32 1326507024, %v1738
          %v1754 = vor.u32 %v1752, %v1753
          %vm1755 = vcmp.lt.s32.totalorder %v1736, 1
          %vm1756 = vcmp.lt.s32.totalorder %v1736, 2
          %vm1757 = vcmp.lt.s32.totalorder %v1736, 3
          %vm1758 = vcmp.lt.s32.totalorder %v1736, 4
          %v1759 = vsel %vm1755, %v1739, %v1742
          %v1760 = vsel %vm1758, %v1748, 2102212464
          %v1761 = vsel %vm1757, %v1745, %v1760
          %v1762 = vsel %vm1756, %v1759, %v1761
          %v1763 = vsel %vm1755, %v1742, %v1745
          %v1764 = vsel %vm1758, %v1751, 920167782
          %v1765 = vsel %vm1757, %v1748, %v1764
          %v1766 = vsel %vm1756, %v1763, %v1765
          %v1767 = vsel %vm1755, %v1745, %v1748
          %v1768 = vsel %vm1758, %v1754, 1326507024
          %v1769 = vsel %vm1757, %v1751, %v1768
          %v1770 = vsel %vm1756, %v1767, %v1769
          %v1771 = vshll.u32 %v1731, 8
          %v1772 = vmul.u32.u64.compose %v1771, %v1770
          %v1773 = vextract.low.u32 %v1772
          %v1774 = vextract.high.u32 %v1772
          %v1775 = vmul.u32.u64.compose %v1771, %v1766
          %v1776 = vextract.low.u32 %v1775
          %v1777 = vextract.high.u32 %v1775
          %v1778 = vmul.u32 %v1771, %v1762
          %v1779 = vadd.s32 %v1774, %v1776
          %vm1780 = vc.u32 %v1774, %v1776
          %v1781 = vadd.s32 %v1777, 1
          %v1782 = vsel %vm1780, %v1781, %v1777
          %v1783 = vadd.s32 %v1778, %v1782
          %v1784 = vadd.s32 %v1783, 536870912
          %v1785 = vshrl.u32 %v1784, 30
          %v1786 = vshll.u32 %v1785, 30
          %v1787 = vsub.s32 %v1783, %v1786
          %vm1788 = vcmp.lt.s32.totalorder %v1787, 0
          %v1789 = vsub.s32 0, %v1787
          %v1790 = vsel %vm1788, %v1789, %v1787
          %v1791 = vclz %v1790
          %v1792 = vsub.s32 %v1791, 2
          %vm1793 = vcmp.gt.s32.totalorder 0, %v1792
          %v1794 = vsel %vm1793, 0, %v1792
          %v1795 = vsub.s32 32, %v1794
          %v1796 = vshll.u32 %v1787, %v1794
          %v1797 = vshrl.u32 %v1779, %v1795
          %v1798 = vor.u32 %v1796, %v1797
          %v1799 = vsub.s32 4294967266, %v1794
          %v1800 = vadd.s32 %v1799, 127
          %v1801 = vshll.u32 %v1800, 23
          %v1802 = vor.u32 4788187, %v1801
          %v1803 = vand.u32 2147483647, %v1802
          %v1805 = vcvt.s32.f32 %v1798
          %v1806 = vmul.f32 %v1805, %v1803
          %v1807 = vxor.u32 %v1806, 2147483648
          %v1808 = vsel %vm1725, %v1807, %v1806
          %v1809 = vsub.s32 4, %v1785
          %v1810 = vsel %vm1725, %v1809, %v1785
          %v1811 = vsel %vm1724, %v997, %v1808
          %v1812 = vsel %vm1724, 0, %v1810
          %v1813 = vcosq.f32.pop %v1811
          %v1814 = vsinq.f32.pop %v1811
          %vm1815 = vweird.f32 %v997
          %v1816 = vand.u32 %v1812, 3
          %vm1817 = vcmp.lt.s32.totalorder %v1816, 2
          %vm1818 = vcmp.eq.s32.totalorder %v1816, 0
          %v1819 = vxor.u32 %v1814, 2147483648
          %v1820 = vsel %vm1818, %v1813, %v1819
          %vm1821 = vcmp.eq.s32.totalorder %v1816, 2
          %v1822 = vxor.u32 %v1813, 2147483648
          %v1823 = vsel %vm1821, %v1822, %v1814
          %v1824 = vsel %vm1817, %v1820, %v1823
          %v1825 = vsel %vm1815, nan, %v1824
          %v1826 = vmul.f32 %v257, %v1516
          %v1827 = vmul.f32 %v361, %v1619
          %v1828 = vmul.f32 %v465, %v1722
          %v1829 = vmul.f32 %v569, %v1825
          %v1830 = vmul.f32 %v672, %v1101
          %v1831 = vmul.f32 %v775, %v1205
          %v1832 = vmul.f32 %v878, %v1309
          %v1833 = vmul.f32 %v981, %v1413
          %v1834 = vadd.f32 %v1826, %v1830
          %v1835 = vadd.f32 %v1827, %v1831
          %v1836 = vadd.f32 %v1828, %v1832
          %v1837 = vadd.f32 %v1829, %v1833
          %v1838 = vmul.f32 %v672, %v1516
          %v1839 = vmul.f32 %v775, %v1619
          %v1840 = vmul.f32 %v878, %v1722
          %v1841 = vmul.f32 %v981, %v1825
          %v1842 = vmul.f32 %v257, %v1101
          %v1843 = vmul.f32 %v361, %v1205
          %v1844 = vmul.f32 %v465, %v1309
          %v1845 = vmul.f32 %v569, %v1413
          %v1846 = vsub.f32 %v1838, %v1842
          %v1847 = vsub.f32 %v1839, %v1843
          %v1848 = vsub.f32 %v1840, %v1844
          %v1849 = vsub.f32 %v1841, %v1845
          %s1850 = sadd.s32 %s143, 1152
          %s1851 = scalar_lea.vmem %s134, %s1850 [#allocation5]
          %1852 = vst [vmem:[%s1851] sm:$0xff] %v1834
          %1853 = vst [vmem:[%s1851 + $0x8] sm:$0xff] %v1835
          %1854 = vst [vmem:[%s1851 + $0x10] sm:$0xff] %v1836
          %1855 = vst [vmem:[%s1851 + $0x18] sm:$0xff] %v1837
          %s1856 = sadd.s32 %s143, 1536
          %s1857 = scalar_lea.vmem %s134, %s1856 [#allocation5]
          %1858 = vst [vmem:[%s1857] sm:$0xff] %v1846
          %1859 = vst [vmem:[%s1857 + $0x8] sm:$0xff] %v1847
          %1860 = vst [vmem:[%s1857 + $0x10] sm:$0xff] %v1848
          %1861 = vst [vmem:[%s1857 + $0x18] sm:$0xff] %v1849
          %v1862 = vmul.f32 %v1834, %v1516
          %v1863 = vmul.f32 %v1835, %v1619
          %v1864 = vmul.f32 %v1836, %v1722
          %v1865 = vmul.f32 %v1837, %v1825
          %v1866 = vmul.f32 %v1846, %v1101
          %v1867 = vmul.f32 %v1847, %v1205
          %v1868 = vmul.f32 %v1848, %v1309
          %v1869 = vmul.f32 %v1849, %v1413
          %v1870 = vadd.f32 %v1862, %v1866
          %v1871 = vadd.f32 %v1863, %v1867
          %v1872 = vadd.f32 %v1864, %v1868
          %v1873 = vadd.f32 %v1865, %v1869
          %v1874 = vmul.f32 %v1846, %v1516
          %v1875 = vmul.f32 %v1847, %v1619
          %v1876 = vmul.f32 %v1848, %v1722
          %v1877 = vmul.f32 %v1849, %v1825
          %v1878 = vmul.f32 %v1834, %v1101
          %v1879 = vmul.f32 %v1835, %v1205
          %v1880 = vmul.f32 %v1836, %v1309
          %v1881 = vmul.f32 %v1837, %v1413
          %v1882 = vsub.f32 %v1874, %v1878
          %v1883 = vsub.f32 %v1875, %v1879
          %v1884 = vsub.f32 %v1876, %v1880
          %v1885 = vsub.f32 %v1877, %v1881
          %s1886 = sadd.s32 %s143, 1920
          %s1887 = scalar_lea.vmem %s134, %s1886 [#allocation5]
          %1888 = vst [vmem:[%s1887] sm:$0xff] %v1870
          %1889 = vst [vmem:[%s1887 + $0x8] sm:$0xff] %v1871
          %1890 = vst [vmem:[%s1887 + $0x10] sm:$0xff] %v1872
          %1891 = vst [vmem:[%s1887 + $0x18] sm:$0xff] %v1873
          %s1892 = sadd.s32 %s143, 2304
          %s1893 = scalar_lea.vmem %s134, %s1892 [#allocation5]
          %1894 = vst [vmem:[%s1893] sm:$0xff] %v1882
          %1895 = vst [vmem:[%s1893 + $0x8] sm:$0xff] %v1883
          %1896 = vst [vmem:[%s1893 + $0x10] sm:$0xff] %v1884
          %1897 = vst [vmem:[%s1893 + $0x18] sm:$0xff] %v1885
          %v1898 = vmul.f32 %v1870, %v1516
          %v1899 = vmul.f32 %v1871, %v1619
          %v1900 = vmul.f32 %v1872, %v1722
          %v1901 = vmul.f32 %v1873, %v1825
          %v1902 = vmul.f32 %v1882, %v1101
          %v1903 = vmul.f32 %v1883, %v1205
          %v1904 = vmul.f32 %v1884, %v1309
          %v1905 = vmul.f32 %v1885, %v1413
          %v1906 = vadd.f32 %v1898, %v1902
          %v1907 = vadd.f32 %v1899, %v1903
          %v1908 = vadd.f32 %v1900, %v1904
          %v1909 = vadd.f32 %v1901, %v1905
          %v1910 = vmul.f32 %v1882, %v1516
          %v1911 = vmul.f32 %v1883, %v1619
          %v1912 = vmul.f32 %v1884, %v1722
          %v1913 = vmul.f32 %v1885, %v1825
          %v1914 = vmul.f32 %v1870, %v1101
          %v1915 = vmul.f32 %v1871, %v1205
          %v1916 = vmul.f32 %v1872, %v1309
          %v1917 = vmul.f32 %v1873, %v1413
          %v1918 = vsub.f32 %v1910, %v1914
          %v1919 = vsub.f32 %v1911, %v1915
          %v1920 = vsub.f32 %v1912, %v1916
          %v1921 = vsub.f32 %v1913, %v1917
          %s1922 = sadd.s32 %s143, 2688
          %s1923 = scalar_lea.vmem %s134, %s1922 [#allocation5]
          %1924 = vst [vmem:[%s1923] sm:$0xff] %v1906
          %1925 = vst [vmem:[%s1923 + $0x8] sm:$0xff] %v1907
          %1926 = vst [vmem:[%s1923 + $0x10] sm:$0xff] %v1908
          %1927 = vst [vmem:[%s1923 + $0x18] sm:$0xff] %v1909
          %s1928 = sadd.s32 %s143, 3072
          %s1929 = scalar_lea.vmem %s134, %s1928 [#allocation5]
          %1930 = vst [vmem:[%s1929] sm:$0xff] %v1918
          %1931 = vst [vmem:[%s1929 + $0x8] sm:$0xff] %v1919
          %1932 = vst [vmem:[%s1929 + $0x10] sm:$0xff] %v1920
          %1933 = vst [vmem:[%s1929 + $0x18] sm:$0xff] %v1921
          %v1934 = vmul.f32 %v1906, %v1516
          %v1935 = vmul.f32 %v1907, %v1619
          %v1936 = vmul.f32 %v1908, %v1722
          %v1937 = vmul.f32 %v1909, %v1825
          %v1938 = vmul.f32 %v1918, %v1101
          %v1939 = vmul.f32 %v1919, %v1205
          %v1940 = vmul.f32 %v1920, %v1309
          %v1941 = vmul.f32 %v1921, %v1413
          %v1942 = vadd.f32 %v1934, %v1938
          %v1943 = vadd.f32 %v1935, %v1939
          %v1944 = vadd.f32 %v1936, %v1940
          %v1945 = vadd.f32 %v1937, %v1941
          %v1946 = vmul.f32 %v1918, %v1516
          %v1947 = vmul.f32 %v1919, %v1619
          %v1948 = vmul.f32 %v1920, %v1722
          %v1949 = vmul.f32 %v1921, %v1825
          %v1950 = vmul.f32 %v1906, %v1101
          %v1951 = vmul.f32 %v1907, %v1205
          %v1952 = vmul.f32 %v1908, %v1309
          %v1953 = vmul.f32 %v1909, %v1413
          %v1954 = vsub.f32 %v1946, %v1950
          %v1955 = vsub.f32 %v1947, %v1951
          %v1956 = vsub.f32 %v1948, %v1952
          %v1957 = vsub.f32 %v1949, %v1953
          %s1958 = sadd.s32 %s143, 3456
          %s1959 = scalar_lea.vmem %s134, %s1958 [#allocation5]
          %1960 = vst [vmem:[%s1959] sm:$0xff] %v1942
          %1961 = vst [vmem:[%s1959 + $0x8] sm:$0xff] %v1943
          %1962 = vst [vmem:[%s1959 + $0x10] sm:$0xff] %v1944
          %1963 = vst [vmem:[%s1959 + $0x18] sm:$0xff] %v1945
          %s1964 = sadd.s32 %s143, 3840
          %s1965 = scalar_lea.vmem %s134, %s1964 [#allocation5]
          %1966 = vst [vmem:[%s1965] sm:$0xff] %v1954
          %1967 = vst [vmem:[%s1965 + $0x8] sm:$0xff] %v1955
          %1968 = vst [vmem:[%s1965 + $0x10] sm:$0xff] %v1956
          %1969 = vst [vmem:[%s1965 + $0x18] sm:$0xff] %v1957
          %v1970 = vmul.f32 %v1942, %v1516
          %v1971 = vmul.f32 %v1943, %v1619
          %v1972 = vmul.f32 %v1944, %v1722
          %v1973 = vmul.f32 %v1945, %v1825
          %v1974 = vmul.f32 %v1954, %v1101
          %v1975 = vmul.f32 %v1955, %v1205
          %v1976 = vmul.f32 %v1956, %v1309
          %v1977 = vmul.f32 %v1957, %v1413
          %v1978 = vadd.f32 %v1970, %v1974
          %v1979 = vadd.f32 %v1971, %v1975
          %v1980 = vadd.f32 %v1972, %v1976
          %v1981 = vadd.f32 %v1973, %v1977
          %v1982 = vmul.f32 %v1954, %v1516
          %v1983 = vmul.f32 %v1955, %v1619
          %v1984 = vmul.f32 %v1956, %v1722
          %v1985 = vmul.f32 %v1957, %v1825
          %v1986 = vmul.f32 %v1942, %v1101
          %v1987 = vmul.f32 %v1943, %v1205
          %v1988 = vmul.f32 %v1944, %v1309
          %v1989 = vmul.f32 %v1945, %v1413
          %v1990 = vsub.f32 %v1982, %v1986
          %v1991 = vsub.f32 %v1983, %v1987
          %v1992 = vsub.f32 %v1984, %v1988
          %v1993 = vsub.f32 %v1985, %v1989
          %s1994 = sadd.s32 %s143, 4224
          %s1995 = scalar_lea.vmem %s134, %s1994 [#allocation5]
          %1996 = vst [vmem:[%s1995] sm:$0xff] %v1978
          %1997 = vst [vmem:[%s1995 + $0x8] sm:$0xff] %v1979
          %1998 = vst [vmem:[%s1995 + $0x10] sm:$0xff] %v1980
          %1999 = vst [vmem:[%s1995 + $0x18] sm:$0xff] %v1981
          %s2000 = sadd.s32 %s143, 4608
          %s2001 = scalar_lea.vmem %s134, %s2000 [#allocation5]
          %2002 = vst [vmem:[%s2001] sm:$0xff] %v1990
          %2003 = vst [vmem:[%s2001 + $0x8] sm:$0xff] %v1991
          %2004 = vst [vmem:[%s2001 + $0x10] sm:$0xff] %v1992
          %2005 = vst [vmem:[%s2001 + $0x18] sm:$0xff] %v1993
          %v2006 = vmul.f32 %v1978, %v1516
          %v2007 = vmul.f32 %v1979, %v1619
          %v2008 = vmul.f32 %v1980, %v1722
          %v2009 = vmul.f32 %v1981, %v1825
          %v2010 = vmul.f32 %v1990, %v1101
          %v2011 = vmul.f32 %v1991, %v1205
          %v2012 = vmul.f32 %v1992, %v1309
          %v2013 = vmul.f32 %v1993, %v1413
          %v2014 = vadd.f32 %v2006, %v2010
          %v2015 = vadd.f32 %v2007, %v2011
          %v2016 = vadd.f32 %v2008, %v2012
          %v2017 = vadd.f32 %v2009, %v2013
          %v2018 = vmul.f32 %v1990, %v1516
          %v2019 = vmul.f32 %v1991, %v1619
          %v2020 = vmul.f32 %v1992, %v1722
          %v2021 = vmul.f32 %v1993, %v1825
          %v2022 = vmul.f32 %v1978, %v1101
          %v2023 = vmul.f32 %v1979, %v1205
          %v2024 = vmul.f32 %v1980, %v1309
          %v2025 = vmul.f32 %v1981, %v1413
          %v2026 = vsub.f32 %v2018, %v2022
          %v2027 = vsub.f32 %v2019, %v2023
          %v2028 = vsub.f32 %v2020, %v2024
          %v2029 = vsub.f32 %v2021, %v2025
          %s2030 = sadd.s32 %s143, 4992
          %s2031 = scalar_lea.vmem %s134, %s2030 [#allocation5]
          %2032 = vst [vmem:[%s2031] sm:$0xff] %v2014
          %2033 = vst [vmem:[%s2031 + $0x8] sm:$0xff] %v2015
          %2034 = vst [vmem:[%s2031 + $0x10] sm:$0xff] %v2016
          %2035 = vst [vmem:[%s2031 + $0x18] sm:$0xff] %v2017
          %s2036 = sadd.s32 %s143, 5376
          %s2037 = scalar_lea.vmem %s134, %s2036 [#allocation5]
          %2038 = vst [vmem:[%s2037] sm:$0xff] %v2026
          %2039 = vst [vmem:[%s2037 + $0x8] sm:$0xff] %v2027
          %2040 = vst [vmem:[%s2037 + $0x10] sm:$0xff] %v2028
          %2041 = vst [vmem:[%s2037 + $0x18] sm:$0xff] %v2029
          %v2042 = vmul.f32 %v2014, %v1516
          %v2043 = vmul.f32 %v2015, %v1619
          %v2044 = vmul.f32 %v2016, %v1722
          %v2045 = vmul.f32 %v2017, %v1825
          %v2046 = vmul.f32 %v2026, %v1101
          %v2047 = vmul.f32 %v2027, %v1205
          %v2048 = vmul.f32 %v2028, %v1309
          %v2049 = vmul.f32 %v2029, %v1413
          %v2050 = vadd.f32 %v2042, %v2046
          %v2051 = vadd.f32 %v2043, %v2047
          %v2052 = vadd.f32 %v2044, %v2048
          %v2053 = vadd.f32 %v2045, %v2049
          %v2054 = vmul.f32 %v2026, %v1516
          %v2055 = vmul.f32 %v2027, %v1619
          %v2056 = vmul.f32 %v2028, %v1722
          %v2057 = vmul.f32 %v2029, %v1825
          %v2058 = vmul.f32 %v2014, %v1101
          %v2059 = vmul.f32 %v2015, %v1205
          %v2060 = vmul.f32 %v2016, %v1309
          %v2061 = vmul.f32 %v2017, %v1413
          %v2062 = vsub.f32 %v2054, %v2058
          %v2063 = vsub.f32 %v2055, %v2059
          %v2064 = vsub.f32 %v2056, %v2060
          %v2065 = vsub.f32 %v2057, %v2061
          %s2066 = sadd.s32 %s143, 5760
          %s2067 = scalar_lea.vmem %s134, %s2066 [#allocation5]
          %2068 = vst [vmem:[%s2067] sm:$0xff] %v2050
          %2069 = vst [vmem:[%s2067 + $0x8] sm:$0xff] %v2051
          %2070 = vst [vmem:[%s2067 + $0x10] sm:$0xff] %v2052
          %2071 = vst [vmem:[%s2067 + $0x18] sm:$0xff] %v2053
          %s2072 = sadd.s32 %s143, 6144
          %s2073 = scalar_lea.vmem %s134, %s2072 [#allocation5]
          %2074 = vst [vmem:[%s2073] sm:$0xff] %v2062
          %2075 = vst [vmem:[%s2073 + $0x8] sm:$0xff] %v2063
          %2076 = vst [vmem:[%s2073 + $0x10] sm:$0xff] %v2064
          %2077 = vst [vmem:[%s2073 + $0x18] sm:$0xff] %v2065
          %v2078 = vmul.f32 %v2050, %v1516
          %v2079 = vmul.f32 %v2051, %v1619
          %v2080 = vmul.f32 %v2052, %v1722
          %v2081 = vmul.f32 %v2053, %v1825
          %v2082 = vmul.f32 %v2062, %v1101
          %v2083 = vmul.f32 %v2063, %v1205
          %v2084 = vmul.f32 %v2064, %v1309
          %v2085 = vmul.f32 %v2065, %v1413
          %v2086 = vadd.f32 %v2078, %v2082
          %v2087 = vadd.f32 %v2079, %v2083
          %v2088 = vadd.f32 %v2080, %v2084
          %v2089 = vadd.f32 %v2081, %v2085
          %v2090 = vmul.f32 %v2062, %v1516
          %v2091 = vmul.f32 %v2063, %v1619
          %v2092 = vmul.f32 %v2064, %v1722
          %v2093 = vmul.f32 %v2065, %v1825
          %v2094 = vmul.f32 %v2050, %v1101
          %v2095 = vmul.f32 %v2051, %v1205
          %v2096 = vmul.f32 %v2052, %v1309
          %v2097 = vmul.f32 %v2053, %v1413
          %v2098 = vsub.f32 %v2090, %v2094
          %v2099 = vsub.f32 %v2091, %v2095
          %v2100 = vsub.f32 %v2092, %v2096
          %v2101 = vsub.f32 %v2093, %v2097
          %s2102 = sadd.s32 %s143, 6528
          %s2103 = scalar_lea.vmem %s134, %s2102 [#allocation5]
          %2104 = vst [vmem:[%s2103] sm:$0xff] %v2086
          %2105 = vst [vmem:[%s2103 + $0x8] sm:$0xff] %v2087
          %2106 = vst [vmem:[%s2103 + $0x10] sm:$0xff] %v2088
          %2107 = vst [vmem:[%s2103 + $0x18] sm:$0xff] %v2089
          %s2108 = sadd.s32 %s143, 6912
          %s2109 = scalar_lea.vmem %s134, %s2108 [#allocation5]
          %2110 = vst [vmem:[%s2109] sm:$0xff] %v2098
          %2111 = vst [vmem:[%s2109 + $0x8] sm:$0xff] %v2099
          %2112 = vst [vmem:[%s2109 + $0x10] sm:$0xff] %v2100
          %2113 = vst [vmem:[%s2109 + $0x18] sm:$0xff] %v2101
          %v2114 = vmul.f32 %v2086, %v1516
          %v2115 = vmul.f32 %v2087, %v1619
          %v2116 = vmul.f32 %v2088, %v1722
          %v2117 = vmul.f32 %v2089, %v1825
          %v2118 = vmul.f32 %v2098, %v1101
          %v2119 = vmul.f32 %v2099, %v1205
          %v2120 = vmul.f32 %v2100, %v1309
          %v2121 = vmul.f32 %v2101, %v1413
          %v2122 = vadd.f32 %v2114, %v2118
          %v2123 = vadd.f32 %v2115, %v2119
          %v2124 = vadd.f32 %v2116, %v2120
          %v2125 = vadd.f32 %v2117, %v2121
          %v2126 = vmul.f32 %v2098, %v1516
          %v2127 = vmul.f32 %v2099, %v1619
          %v2128 = vmul.f32 %v2100, %v1722
          %v2129 = vmul.f32 %v2101, %v1825
          %v2130 = vmul.f32 %v2086, %v1101
          %v2131 = vmul.f32 %v2087, %v1205
          %v2132 = vmul.f32 %v2088, %v1309
          %v2133 = vmul.f32 %v2089, %v1413
          %v2134 = vsub.f32 %v2126, %v2130
          %v2135 = vsub.f32 %v2127, %v2131
          %v2136 = vsub.f32 %v2128, %v2132
          %v2137 = vsub.f32 %v2129, %v2133
          %s2138 = sadd.s32 %s143, 7296
          %s2139 = scalar_lea.vmem %s134, %s2138 [#allocation5]
          %2140 = vst [vmem:[%s2139] sm:$0xff] %v2122
          %2141 = vst [vmem:[%s2139 + $0x8] sm:$0xff] %v2123
          %2142 = vst [vmem:[%s2139 + $0x10] sm:$0xff] %v2124
          %2143 = vst [vmem:[%s2139 + $0x18] sm:$0xff] %v2125
          %s2144 = sadd.s32 %s143, 7680
          %s2145 = scalar_lea.vmem %s134, %s2144 [#allocation5]
          %2146 = vst [vmem:[%s2145] sm:$0xff] %v2134
          %2147 = vst [vmem:[%s2145 + $0x8] sm:$0xff] %v2135
          %2148 = vst [vmem:[%s2145 + $0x10] sm:$0xff] %v2136
          %2149 = vst [vmem:[%s2145 + $0x18] sm:$0xff] %v2137
        $region33: #{tpu_custom_call.1} parent=23 // loop_footer
          %s142 = sadd.s32 1, %s138
        $region34: #{tpu_custom_call.1} parent=23 // loop_footer_branch
          %137 = sbr.rel target = $region30
        $region35: #{tpu_custom_call.1} parent=23 // loop_exit
          _
        %s2150 = sand.u32 %s52, 1
        %s2151 = scalar_lea.sflag [#allocation4], %s2150
        %s2152 = sand.u32 %s52, 1
        %s2153 = smul.addr %s2152, 8064
        %s2154 = scalar_lea.vmem [#allocation5], %s2153
        // Predicated region
        $region36: #{tpu_custom_call.1} parent=23 // pred_check
          %p2155 = pneg %p62
        $region37: #{tpu_custom_call.1} parent=23 // pred_check_branch
          %2157 = sbr.rel (%p2155) target = $region39
        $region38: #{tpu_custom_call.1} parent=23 // pred_region
          #allocation7 [shape = 'u32[6]{0}', space=smem, size = 0x18, scoped, tag = 'DMA stride descriptor']
          %s2158 = smul.u32 48, %s18
          %s2160 = ssub.s32 129024, 129024
          %2161 = vsyncadd %s2151, %s2160
          %s2162 = smul.addr %s2158, 128
          %s2163 = scalar_lea.hbm %s1, %s2162
          %s2165 = sshll.u32 1, 14
          %s2166 = sxor.u32 4294967295, %s2165
          %s2169 = sshll.u32 7, 18
          %s2170 = sxor.u32 4294967295, %s2169
          %s2171 = sand.u32 0, %s2170
          %s2173 = sor.u32 %s2171, 0
          %s2175 = sshll.u32 3, 24
          %s2176 = sxor.u32 4294967295, %s2175
          %s2177 = sand.u32 %s2173, %s2176
          %s2179 = sor.u32 %s2177, 0
          %s2180 = sshll.u32 %s2154, 4
          %s2181 = int_to_ptr.vmem [resolvable:$true] %s2180
          %2187 = sst [smem:[#allocation7]] 6144
          %s2188 = scalar_lea.smem [#allocation7], 1
          %2189 = sst [smem:[%s2188]] 12288
          %s2190 = scalar_lea.smem [#allocation7], 2
          %2191 = sst [smem:[%s2190]] 48
          %s2192 = scalar_lea.smem [#allocation7], 3
          %2193 = sst [smem:[%s2192]] 128
          %s2194 = scalar_lea.smem [#allocation7], 4
          %2195 = sst [smem:[%s2194]] 128
          %s2196 = scalar_lea.smem [#allocation7], 5
          %2197 = sst [smem:[%s2196]] 8
          %2199 = dma.general %s2181, 129024, %s2163, %s2151, [#allocation6], [#allocation7], %s2179, 0
        $region39: #{tpu_custom_call.1} parent=23 // pred_fallthru
          _
      $region24: #{tpu_custom_call.1} parent=5 // pred_fallthru
        _
      %p2200 = scmp.le.s32.totalorder 2, %s13
      // Predicated region
      $region40: #{tpu_custom_call.1} parent=5 // pred_check
        %p2201 = pneg %p2200
      $region41: #{tpu_custom_call.1} parent=5 // pred_check_branch
        %2203 = sbr.rel (%p2201) target = $region43
      $region42: #{tpu_custom_call.1} parent=5 // pred_region
        %s2204 = ssub.s32 %s13, 2
        // Predicated region
        $region44: #{tpu_custom_call.1} parent=42 // pred_check
          %p2205 = pneg %p68
        $region45: #{tpu_custom_call.1} parent=42 // pred_check_branch
          %2207 = sbr.rel (%p2205) target = $region47
        $region46: #{tpu_custom_call.1} parent=42 // pred_region
          %s2208 = sand.u32 %s53, 1
          %s2209 = scalar_lea.sflag [#allocation4], %s2208
          %s2210 = sand.u32 %s53, 1
          %s2211 = smul.addr %s2210, 8064
          %s2212 = scalar_lea.vmem [#allocation5], %s2211
          %2213 = dma.done %s2209, 129024
        $region47: #{tpu_custom_call.1} parent=42 // pred_fallthru
          _
      $region43: #{tpu_custom_call.1} parent=5 // pred_fallthru
        _
    $region6: #{tpu_custom_call.1} parent=1 // loop_footer
      %s17 = sadd.s32 1, %s13
    $region7: #{tpu_custom_call.1} parent=1 // loop_footer_branch
      %12 = sbr.rel target = $region3
    $region8: #{tpu_custom_call.1} parent=1 // loop_exit
      _
    %2214 = vsyncpa [#allocation3], 1
    %s2215 = scalar_lea.sflag [#allocation3], 1
    %2216 = vsyncpa %s2215, 1
    %2217 = vsyncpa [#allocation4], 1
    %s2218 = scalar_lea.sflag [#allocation4], 1
    %2219 = vsyncpa %s2218, 1

</llo_original>
